<compile_context>
chip_gen: v7x
topology: tpu7x:2x2x1
jax: 0.10.0
libtpu: 0.0.40
codegen_flags: <defaults>
</compile_context>

<pallas_src>
import jax
import jax.numpy as jnp
from jax.experimental import pallas as pl
from jax.experimental.pallas import tpu as pltpu

# ----------------------------- model dimensions ------------------------------
NUM_FLOAT_FEATURES = 10
DENSE_IN_PAD = 16                     # 10 padded up to a sublane multiple of 8
DENSE_OUT = 8                         # TestDenseArch: Linear(10 -> 8)
EMB_DIM = 8
NUM_EMBEDDINGS = 64
POOLING_AVG = 4

TOWER0_IN = 2 * EMB_DIM               # tables[0] + tables[2]  -> Linear(16 -> 16)
TOWER1_IN = EMB_DIM                   # tables[1]              -> Linear( 8 ->  8)
TOWER2_IN = EMB_DIM                   # weighted_tables[0]     -> Linear( 8 ->  8)
OVER_IN = DENSE_OUT + TOWER0_IN + TOWER1_IN + TOWER2_IN        # 40
OVER_OUT = 16

_MIN_PALLAS_BATCH = 128               # below this, pallas_call overhead > the work


# ------------------------------ Pallas kernel --------------------------------
def _dense_stack_kernel(xT_ref, p0T_ref, p1T_ref, p2T_ref,
                        wd_ref, bd_ref, w0_ref, b0_ref, w1_ref, b1_ref,
                        w2_ref, b2_ref, wo_ref, bo_ref, pred_ref):
    """Fused dense/tower/over/sigmoid-mean stack for one batch tile.

    All activations are transposed: batch on the 128-wide lane axis, features
    on sublanes, so the final (1, TB) store is lane-dense.
    """

    def affine_t(w, b, x_t):
        # y^T = W @ x^T + b ; feature dims keep their true (8..40) sizes.
        return jnp.dot(w, x_t, preferred_element_type=jnp.float32) + b

    dense_t = affine_t(wd_ref[...], bd_ref[...], xT_ref[...])    # (8,  tb)
    t0_t = affine_t(w0_ref[...], b0_ref[...], p0T_ref[...])      # (16, tb)
    t1_t = affine_t(w1_ref[...], b1_ref[...], p1T_ref[...])      # (8,  tb)
    t2_t = affine_t(w2_ref[...], b2_ref[...], p2T_ref[...])      # (8,  tb)

    # over-arch linear on the (virtual) concat [dense; t0; t1; t2]: split the
    # over weight column-wise instead of materializing the concat in VMEM.
    wo = wo_ref[...]
    over_t = bo_ref[...] + jnp.dot(wo[:, 0:DENSE_OUT], dense_t,
                                   preferred_element_type=jnp.float32)
    off = DENSE_OUT
    for part in (t0_t, t1_t, t2_t):
        f = part.shape[0]
        over_t = over_t + jnp.dot(wo[:, off:off + f], part,
                                  preferred_element_type=jnp.float32)
        off += f

    # pred = sigmoid(mean over the 16 over-arch outputs): sublane reduce (XLU)
    # + exp (EUP); the (1, tb) store is fully lane-dense (no masked vst).
    m = jnp.mean(over_t, axis=0, keepdims=True)                  # (1, tb)
    pred_ref[...] = (1.0 / (1.0 + jnp.exp(-m))).astype(pred_ref.dtype)


# ------------------------------ Pallas wrapper --------------------------------
def _choose_batch_tile(batch: int) -> int:
    """Multiple of 128 lanes; big enough to amortize the ~0.35us/grid-step
    overhead, small enough to stay far under the scoped-VMEM limit, and never
    so big that the grid collapses to a single (unpipelined) step."""
    half = (batch // 2) // 128 * 128
    return max(128, min(4096, half))


def _dense_stack_pallas(params, x, p0, p1, p2):
    batch = x.shape[0]
    tb = _choose_batch_tile(batch)
    bp = pl.cdiv(batch, tb) * tb

    def _prep(a, rows_pad=None):
        # [B, F] -> lane-major [F(_pad), Bp]: batch on the 128-wide lane axis.
        a = a.astype(jnp.float32).T
        pad_rows = 0 if rows_pad is None else rows_pad - a.shape[0]
        if bp != batch or pad_rows:
            a = jnp.pad(a, ((0, pad_rows), (0, bp - batch)))
        return a

    # Dense-arch input/weight padded 10 -> 16 along the contraction dim so the
    # MXU tiles are sublane-aligned (zeros contribute nothing to the dot).
    xT = _prep(x, DENSE_IN_PAD)
    p0T, p1T, p2T = _prep(p0), _prep(p1), _prep(p2)

    wd = jnp.pad(params["dense"]["w"],
                 ((0, 0), (0, DENSE_IN_PAD - NUM_FLOAT_FEATURES)))
    bd = params["dense"]["b"][:, None]
    w0 = params["tower0"]["w"]; b0 = params["tower0"]["b"][:, None]
    w1 = params["tower1"]["w"]; b1 = params["tower1"]["b"][:, None]
    w2 = params["tower2"]["w"]; b2 = params["tower2"]["b"][:, None]
    wo = params["over"]["w"];   bo = params["over"]["b"][:, None]

    def batch_block(rows):                       # tiled along the batch axis
        return pl.BlockSpec((rows, tb), lambda i: (0, i))

    def const_block(shape):                      # index-invariant resident weights
        return pl.BlockSpec(shape, lambda i: (0, 0))

    pred = pl.pallas_call(
        _dense_stack_kernel,
        out_shape=jax.ShapeDtypeStruct((1, bp), jnp.float32),
        grid_spec=pltpu.PrefetchScalarGridSpec(
            num_scalar_prefetch=0,
            grid=(bp // tb,),
            in_specs=[
                batch_block(DENSE_IN_PAD),
                batch_block(TOWER0_IN),
                batch_block(TOWER1_IN),
                batch_block(TOWER2_IN),
                const_block((DENSE_OUT, DENSE_IN_PAD)),
                const_block((DENSE_OUT, 1)),
                const_block((TOWER0_IN, TOWER0_IN)),
                const_block((TOWER0_IN, 1)),
                const_block((TOWER1_IN, TOWER1_IN)),
                const_block((TOWER1_IN, 1)),
                const_block((TOWER2_IN, TOWER2_IN)),
                const_block((TOWER2_IN, 1)),
                const_block((OVER_OUT, OVER_IN)),
                const_block((OVER_OUT, 1)),
            ],
            out_specs=pl.BlockSpec((1, tb), lambda i: (0, i)),
        ),
        compiler_params=pltpu.CompilerParams(
            # batch tiles are independent -> shard across TensorCores
            dimension_semantics=("parallel",),
        ),
    )(xT, p0T, p1T, p2T, wd, bd, w0, b0, w1, b1, w2, b2, wo, bo)
    return pred[0, :batch]


# -------------------------- embedding-bag pooling -----------------------------
def _pool_towers(params, idlist, idscore, batch):
    """EmbeddingBagCollection sum-pooling per feature, grouped per tower."""
    # TODO(synk): jagged KJT gather + segment-sum pooling stays in plain JAX; a
    # Pallas version needs a data-dependent manual-DMA gather (pl.ANY +
    # make_async_copy) which is out of scope here.
    def pool(table, indices, segment_ids, weights=None):
        rows = jnp.take(table, indices, axis=0)
        if weights is not None:
            rows = rows * weights[:, None]
        return jax.ops.segment_sum(rows, segment_ids, num_segments=batch)

    tables = params["tables"]
    pooled_f0 = pool(tables["f0"], *idlist["f0"])
    pooled_f1 = pool(tables["f1"], *idlist["f1"])
    pooled_f2 = pool(tables["f2"], *idlist["f2"])
    widx, wseg, wts = idscore["wf0"]
    pooled_w0 = pool(tables["wf0"], widx, wseg, wts)

    p0 = jnp.concatenate([pooled_f0, pooled_f2], axis=1)   # tower_0 interaction input
    return p0, pooled_f1, pooled_w0


# --------------------------- pure-JAX dense stack ------------------------------
def _dense_stack_jax(params, x, p0, p1, p2):
    """Reference / tiny-batch fallback (XLA-fused)."""
    dense_r = x @ params["dense"]["w"].T + params["dense"]["b"]
    t0 = p0 @ params["tower0"]["w"].T + params["tower0"]["b"]
    t1 = p1 @ params["tower1"]["w"].T + params["tower1"]["b"]
    t2 = p2 @ params["tower2"]["w"].T + params["tower2"]["b"]
    over_in = jnp.concatenate([dense_r, t0, t1, t2], axis=1)
    over_r = over_in @ params["over"]["w"].T + params["over"]["b"]
    m = jnp.mean(over_r, axis=1)
    return 1.0 / (1.0 + jnp.exp(-m))


# ------------------------------- model forward --------------------------------
def tower_collection_forward(params, float_features, idlist, idscore, label=None):
    batch = float_features.shape[0]
    p0, p1, p2 = _pool_towers(params, idlist, idscore, batch)
    if batch < _MIN_PALLAS_BATCH:
        # pallas_call launch + per-step overhead would dwarf a few hundred FLOPs.
        pred = _dense_stack_jax(params, float_features, p0, p1, p2)
    else:
        pred = _dense_stack_pallas(params, float_features, p0, p1, p2)
    if label is None:
        return pred                                    # eval mode
    # training mode: BCE-with-logits applied to pred (faithful to the torch module).
    loss = jnp.mean(jnp.maximum(pred, 0.0) - pred * label
                    + jnp.log1p(jnp.exp(-jnp.abs(pred))))
    return loss, pred


def _reference_forward(params, float_features, idlist, idscore):
    batch = float_features.shape[0]
    p0, p1, p2 = _pool_towers(params, idlist, idscore, batch)
    return _dense_stack_jax(params, float_features, p0, p1, p2)


# --------------------------------- params -------------------------------------
def init_params(key):
    def linear(k, out_f, in_f):
        kw, kb = jax.random.split(k)
        bound = 1.0 / (in_f ** 0.5)
        return {
            "w": jax.random.uniform(kw, (out_f, in_f), jnp.float32, -bound, bound),
            "b": jax.random.uniform(kb, (out_f,), jnp.float32, -bound, bound),
        }

    ks = jax.random.split(key, 9)
    return {
        "dense": linear(ks[0], DENSE_OUT, NUM_FLOAT_FEATURES),
        "tower0": linear(ks[1], TOWER0_IN, TOWER0_IN),
        "tower1": linear(ks[2], TOWER1_IN, TOWER1_IN),
        "tower2": linear(ks[3], TOWER2_IN, TOWER2_IN),
        "over": linear(ks[4], OVER_OUT, OVER_IN),
        "tables": {
            "f0": 0.1 * jax.random.normal(ks[5], (NUM_EMBEDDINGS, EMB_DIM), jnp.float32),
            "f1": 0.1 * jax.random.normal(ks[6], (NUM_EMBEDDINGS, EMB_DIM), jnp.float32),
            "f2": 0.1 * jax.random.normal(ks[7], (NUM_EMBEDDINGS, EMB_DIM), jnp.float32),
            "wf0": 0.1 * jax.random.normal(ks[8], (NUM_EMBEDDINGS, EMB_DIM), jnp.float32),
        },
    }


# ---------------------------------- demo ---------------------------------------
if __name__ == "__main__":
    key = jax.random.PRNGKey(0)
    k_params, k_data = jax.random.split(key)
    params = init_params(k_params)

    B = 256  # small demo batch, still large enough to exercise the batch-tiled grid
    ks = jax.random.split(k_data, 12)
    float_features = jax.random.uniform(ks[0], (B, NUM_FLOAT_FEATURES), jnp.float32)

    def make_jagged(k_len, k_idx, k_w=None):
        lengths = jax.random.randint(k_len, (B,), 1, 2 * POOLING_AVG)
        n = int(jnp.sum(lengths))
        idx = jax.random.randint(k_idx, (n,), 0, NUM_EMBEDDINGS)
        seg = jnp.repeat(jnp.arange(B, dtype=jnp.int32), lengths, total_repeat_length=n)
        if k_w is None:
            return idx, seg
        return idx, seg, jax.random.uniform(k_w, (n,), jnp.float32)

    idlist = {
        "f0": make_jagged(ks[1], ks[2]),
        "f1": make_jagged(ks[3], ks[4]),
        "f2": make_jagged(ks[5], ks[6]),
    }
    idscore = {"wf0": make_jagged(ks[7], ks[8], ks[9])}

    # eval-mode forward through the Pallas kernel
    fwd = jax.jit(tower_collection_forward)
    pred = jax.block_until_ready(fwd(params, float_features, idlist, idscore))
    assert pred.shape == (B,)

    # training-mode path (loss in plain JAX)
    label = jax.random.bernoulli(ks[10], 0.5, (B,)).astype(jnp.float32)
    loss, pred_t = jax.block_until_ready(
        jax.jit(tower_collection_forward)(params, float_features, idlist, idscore, label))
    assert bool(jnp.isfinite(loss))

    # pure-JAX reference of the full forward; tolerance covers MXU pass-precision
    # differences between the Mosaic matmuls and XLA's default f32 dots.
    ref = _reference_forward(params, float_features, idlist, idscore)
    assert jnp.allclose(pred, ref, atol=1e-3, rtol=1e-3), float(jnp.max(jnp.abs(pred - ref)))
    assert jnp.allclose(pred_t, pred, atol=1e-6)

    print("KERNEL_OK")
</pallas_src>

<mosaic_0001>
module attributes {stable_mosaic.version = 11 : i64} {
  func.func @_dense_stack_kernel(%arg0: i32, %arg1: memref<16x128xf32, #tpu.memory_space<vmem>>, %arg2: memref<16x128xf32, #tpu.memory_space<vmem>>, %arg3: memref<8x128xf32, #tpu.memory_space<vmem>>, %arg4: memref<8x128xf32, #tpu.memory_space<vmem>>, %arg5: memref<8x16xf32, #tpu.memory_space<vmem>>, %arg6: memref<8x1xf32, #tpu.memory_space<vmem>>, %arg7: memref<16x16xf32, #tpu.memory_space<vmem>>, %arg8: memref<16x1xf32, #tpu.memory_space<vmem>>, %arg9: memref<8x8xf32, #tpu.memory_space<vmem>>, %arg10: memref<8x1xf32, #tpu.memory_space<vmem>>, %arg11: memref<8x8xf32, #tpu.memory_space<vmem>>, %arg12: memref<8x1xf32, #tpu.memory_space<vmem>>, %arg13: memref<16x40xf32, #tpu.memory_space<vmem>>, %arg14: memref<16x1xf32, #tpu.memory_space<vmem>>, %arg15: memref<1x128xf32, #tpu.memory_space<vmem>>) attributes {dimension_semantics = [#tpu.dimension_semantics<parallel>], iteration_bounds = array<i64: 2>, scalar_prefetch = 0 : i64, scratch_operands = 0 : i64, tpu.core_type = #tpu.core_type<tc>, window_params = [{transform_indices = @transform_0, window_bounds = array<i64: 16, 128>}, {transform_indices = @transform_1, window_bounds = array<i64: 16, 128>}, {transform_indices = @transform_2, window_bounds = array<i64: 8, 128>}, {transform_indices = @transform_3, window_bounds = array<i64: 8, 128>}, {pipeline_mode = #tpu.pipeline_mode<synchronous>, transform_indices = @transform_4, window_bounds = array<i64: 8, 16>}, {pipeline_mode = #tpu.pipeline_mode<synchronous>, transform_indices = @transform_5, window_bounds = array<i64: 8, 1>}, {pipeline_mode = #tpu.pipeline_mode<synchronous>, transform_indices = @transform_6, window_bounds = array<i64: 16, 16>}, {pipeline_mode = #tpu.pipeline_mode<synchronous>, transform_indices = @transform_7, window_bounds = array<i64: 16, 1>}, {pipeline_mode = #tpu.pipeline_mode<synchronous>, transform_indices = @transform_8, window_bounds = array<i64: 8, 8>}, {pipeline_mode = #tpu.pipeline_mode<synchronous>, transform_indices = @transform_9, window_bounds = array<i64: 8, 1>}, {pipeline_mode = #tpu.pipeline_mode<synchronous>, transform_indices = @transform_10, window_bounds = array<i64: 8, 8>}, {pipeline_mode = #tpu.pipeline_mode<synchronous>, transform_indices = @transform_11, window_bounds = array<i64: 8, 1>}, {pipeline_mode = #tpu.pipeline_mode<synchronous>, transform_indices = @transform_12, window_bounds = array<i64: 16, 40>}, {pipeline_mode = #tpu.pipeline_mode<synchronous>, transform_indices = @transform_13, window_bounds = array<i64: 16, 1>}, {transform_indices = @transform_14, window_bounds = array<i64: 1, 128>}]} {
    %c0 = arith.constant 0 : index
    %c0_0 = arith.constant 0 : index
    %0 = vector.load %arg5[%c0, %c0_0] : memref<8x16xf32, #tpu.memory_space<vmem>>, vector<8x16xf32>
    %c0_1 = arith.constant 0 : index
    %c0_2 = arith.constant 0 : index
    %1 = vector.load %arg6[%c0_1, %c0_2] : memref<8x1xf32, #tpu.memory_space<vmem>>, vector<8x1xf32>
    %c0_3 = arith.constant 0 : index
    %c0_4 = arith.constant 0 : index
    %2 = vector.load %arg1[%c0_3, %c0_4] : memref<16x128xf32, #tpu.memory_space<vmem>>, vector<16x128xf32>
    %cst = arith.constant dense<0.000000e+00> : vector<8x128xf32>
    %3 = tpu.matmul %0, %2, %cst {dimension_numbers = #tpu.dot_dimension_numbers<[1], [0], [0], [1], [0, 0, 1, 1], [], []>} : vector<8x16xf32>, vector<16x128xf32>, vector<8x128xf32> -> vector<8x128xf32>
    %4 = vector.broadcast %1 : vector<8x1xf32> to vector<8x128xf32>
    %5 = arith.addf %3, %4 : vector<8x128xf32>
    %c0_5 = arith.constant 0 : index
    %c0_6 = arith.constant 0 : index
    %6 = vector.load %arg7[%c0_5, %c0_6] : memref<16x16xf32, #tpu.memory_space<vmem>>, vector<16x16xf32>
    %c0_7 = arith.constant 0 : index
    %c0_8 = arith.constant 0 : index
    %7 = vector.load %arg8[%c0_7, %c0_8] : memref<16x1xf32, #tpu.memory_space<vmem>>, vector<16x1xf32>
    %c0_9 = arith.constant 0 : index
    %c0_10 = arith.constant 0 : index
    %8 = vector.load %arg2[%c0_9, %c0_10] : memref<16x128xf32, #tpu.memory_space<vmem>>, vector<16x128xf32>
    %cst_11 = arith.constant dense<0.000000e+00> : vector<16x128xf32>
    %9 = tpu.matmul %6, %8, %cst_11 {dimension_numbers = #tpu.dot_dimension_numbers<[1], [0], [0], [1], [0, 0, 1, 1], [], []>} : vector<16x16xf32>, vector<16x128xf32>, vector<16x128xf32> -> vector<16x128xf32>
    %10 = vector.broadcast %7 : vector<16x1xf32> to vector<16x128xf32>
    %11 = arith.addf %9, %10 : vector<16x128xf32>
    %c0_12 = arith.constant 0 : index
    %c0_13 = arith.constant 0 : index
    %12 = vector.load %arg9[%c0_12, %c0_13] : memref<8x8xf32, #tpu.memory_space<vmem>>, vector<8x8xf32>
    %c0_14 = arith.constant 0 : index
    %c0_15 = arith.constant 0 : index
    %13 = vector.load %arg10[%c0_14, %c0_15] : memref<8x1xf32, #tpu.memory_space<vmem>>, vector<8x1xf32>
    %c0_16 = arith.constant 0 : index
    %c0_17 = arith.constant 0 : index
    %14 = vector.load %arg3[%c0_16, %c0_17] : memref<8x128xf32, #tpu.memory_space<vmem>>, vector<8x128xf32>
    %cst_18 = arith.constant dense<0.000000e+00> : vector<8x128xf32>
    %15 = tpu.matmul %12, %14, %cst_18 {dimension_numbers = #tpu.dot_dimension_numbers<[1], [0], [0], [1], [0, 0, 1, 1], [], []>} : vector<8x8xf32>, vector<8x128xf32>, vector<8x128xf32> -> vector<8x128xf32>
    %16 = vector.broadcast %13 : vector<8x1xf32> to vector<8x128xf32>
    %17 = arith.addf %15, %16 : vector<8x128xf32>
    %c0_19 = arith.constant 0 : index
    %c0_20 = arith.constant 0 : index
    %18 = vector.load %arg11[%c0_19, %c0_20] : memref<8x8xf32, #tpu.memory_space<vmem>>, vector<8x8xf32>
    %c0_21 = arith.constant 0 : index
    %c0_22 = arith.constant 0 : index
    %19 = vector.load %arg12[%c0_21, %c0_22] : memref<8x1xf32, #tpu.memory_space<vmem>>, vector<8x1xf32>
    %c0_23 = arith.constant 0 : index
    %c0_24 = arith.constant 0 : index
    %20 = vector.load %arg4[%c0_23, %c0_24] : memref<8x128xf32, #tpu.memory_space<vmem>>, vector<8x128xf32>
    %cst_25 = arith.constant dense<0.000000e+00> : vector<8x128xf32>
    %21 = tpu.matmul %18, %20, %cst_25 {dimension_numbers = #tpu.dot_dimension_numbers<[1], [0], [0], [1], [0, 0, 1, 1], [], []>} : vector<8x8xf32>, vector<8x128xf32>, vector<8x128xf32> -> vector<8x128xf32>
    %22 = vector.broadcast %19 : vector<8x1xf32> to vector<8x128xf32>
    %23 = arith.addf %21, %22 : vector<8x128xf32>
    %c0_26 = arith.constant 0 : index
    %c0_27 = arith.constant 0 : index
    %24 = vector.load %arg13[%c0_26, %c0_27] : memref<16x40xf32, #tpu.memory_space<vmem>>, vector<16x40xf32>
    %c0_28 = arith.constant 0 : index
    %c0_29 = arith.constant 0 : index
    %25 = vector.load %arg14[%c0_28, %c0_29] : memref<16x1xf32, #tpu.memory_space<vmem>>, vector<16x1xf32>
    %26 = vector.extract_strided_slice %24 {offsets = [0, 0], sizes = [16, 8], strides = [1, 1]} : vector<16x40xf32> to vector<16x8xf32>
    %cst_30 = arith.constant dense<0.000000e+00> : vector<16x128xf32>
    %27 = tpu.matmul %26, %5, %cst_30 {dimension_numbers = #tpu.dot_dimension_numbers<[1], [0], [0], [1], [0, 0, 1, 1], [], []>} : vector<16x8xf32>, vector<8x128xf32>, vector<16x128xf32> -> vector<16x128xf32>
    %28 = vector.broadcast %25 : vector<16x1xf32> to vector<16x128xf32>
    %29 = arith.addf %28, %27 : vector<16x128xf32>
    %30 = vector.extract_strided_slice %24 {offsets = [0, 8], sizes = [16, 16], strides = [1, 1]} : vector<16x40xf32> to vector<16x16xf32>
    %cst_31 = arith.constant dense<0.000000e+00> : vector<16x128xf32>
    %31 = tpu.matmul %30, %11, %cst_31 {dimension_numbers = #tpu.dot_dimension_numbers<[1], [0], [0], [1], [0, 0, 1, 1], [], []>} : vector<16x16xf32>, vector<16x128xf32>, vector<16x128xf32> -> vector<16x128xf32>
    %32 = arith.addf %29, %31 : vector<16x128xf32>
    %33 = vector.extract_strided_slice %24 {offsets = [0, 24], sizes = [16, 8], strides = [1, 1]} : vector<16x40xf32> to vector<16x8xf32>
    %cst_32 = arith.constant dense<0.000000e+00> : vector<16x128xf32>
    %34 = tpu.matmul %33, %17, %cst_32 {dimension_numbers = #tpu.dot_dimension_numbers<[1], [0], [0], [1], [0, 0, 1, 1], [], []>} : vector<16x8xf32>, vector<8x128xf32>, vector<16x128xf32> -> vector<16x128xf32>
    %35 = arith.addf %32, %34 : vector<16x128xf32>
    %36 = vector.extract_strided_slice %24 {offsets = [0, 32], sizes = [16, 8], strides = [1, 1]} : vector<16x40xf32> to vector<16x8xf32>
    %cst_33 = arith.constant dense<0.000000e+00> : vector<16x128xf32>
    %37 = tpu.matmul %36, %23, %cst_33 {dimension_numbers = #tpu.dot_dimension_numbers<[1], [0], [0], [1], [0, 0, 1, 1], [], []>} : vector<16x8xf32>, vector<8x128xf32>, vector<16x128xf32> -> vector<16x128xf32>
    %38 = arith.addf %35, %37 : vector<16x128xf32>
    %cst_34 = arith.constant dense<0.000000e+00> : vector<128xf32>
    %39 = vector.multi_reduction <add>, %38, %cst_34 [0] : vector<16x128xf32> to vector<128xf32>
    %40 = vector.shape_cast %39 : vector<128xf32> to vector<1x128xf32>
    %cst_35 = arith.constant 1.600000e+01 : f32
    %41 = vector.broadcast %cst_35 : f32 to vector<1x128xf32>
    %42 = arith.divf %40, %41 : vector<1x128xf32>
    %cst_36 = arith.constant 0.000000e+00 : f32
    %43 = vector.broadcast %cst_36 : f32 to vector<1x128xf32>
    %44 = arith.subf %43, %42 : vector<1x128xf32>
    %45 = math.exp %44 : vector<1x128xf32>
    %cst_37 = arith.constant 1.000000e+00 : f32
    %46 = vector.broadcast %cst_37 : f32 to vector<1x128xf32>
    %47 = arith.addf %46, %45 : vector<1x128xf32>
    %cst_38 = arith.constant 1.000000e+00 : f32
    %48 = vector.broadcast %cst_38 : f32 to vector<1x128xf32>
    %49 = arith.divf %48, %47 : vector<1x128xf32>
    %c0_39 = arith.constant 0 : index
    %c0_40 = arith.constant 0 : index
    %50 = vector.load %arg15[%c0_39, %c0_40] : memref<1x128xf32, #tpu.memory_space<vmem>>, vector<1x128xf32>
    tpu.vector_store %arg15[%c0_39, %c0_40], %49 {strides = array<i32>} : memref<1x128xf32, #tpu.memory_space<vmem>>, vector<1x128xf32>,
    return
  }
  func.func @transform_0(%arg0: i32) -> (i32, i32) {
    %c0_i32 = arith.constant 0 : i32
    %c0_i32_0 = arith.constant 0 : i32
    return %c0_i32, %arg0 : i32, i32
  }
  func.func @transform_1(%arg0: i32) -> (i32, i32) {
    %c0_i32 = arith.constant 0 : i32
    %c0_i32_0 = arith.constant 0 : i32
    return %c0_i32, %arg0 : i32, i32
  }
  func.func @transform_2(%arg0: i32) -> (i32, i32) {
    %c0_i32 = arith.constant 0 : i32
    %c0_i32_0 = arith.constant 0 : i32
    return %c0_i32, %arg0 : i32, i32
  }
  func.func @transform_3(%arg0: i32) -> (i32, i32) {
    %c0_i32 = arith.constant 0 : i32
    %c0_i32_0 = arith.constant 0 : i32
    return %c0_i32, %arg0 : i32, i32
  }
  func.func @transform_4(%arg0: i32) -> (i32, i32) {
    %c0_i32 = arith.constant 0 : i32
    %c0_i32_0 = arith.constant 0 : i32
    %c0_i32_1 = arith.constant 0 : i32
    return %c0_i32, %c0_i32_0 : i32, i32
  }
  func.func @transform_5(%arg0: i32) -> (i32, i32) {
    %c0_i32 = arith.constant 0 : i32
    %c0_i32_0 = arith.constant 0 : i32
    %c0_i32_1 = arith.constant 0 : i32
    return %c0_i32, %c0_i32_0 : i32, i32
  }
  func.func @transform_6(%arg0: i32) -> (i32, i32) {
    %c0_i32 = arith.constant 0 : i32
    %c0_i32_0 = arith.constant 0 : i32
    %c0_i32_1 = arith.constant 0 : i32
    return %c0_i32, %c0_i32_0 : i32, i32
  }
  func.func @transform_7(%arg0: i32) -> (i32, i32) {
    %c0_i32 = arith.constant 0 : i32
    %c0_i32_0 = arith.constant 0 : i32
    %c0_i32_1 = arith.constant 0 : i32
    return %c0_i32, %c0_i32_0 : i32, i32
  }
  func.func @transform_8(%arg0: i32) -> (i32, i32) {
    %c0_i32 = arith.constant 0 : i32
    %c0_i32_0 = arith.constant 0 : i32
    %c0_i32_1 = arith.constant 0 : i32
    return %c0_i32, %c0_i32_0 : i32, i32
  }
  func.func @transform_9(%arg0: i32) -> (i32, i32) {
    %c0_i32 = arith.constant 0 : i32
    %c0_i32_0 = arith.constant 0 : i32
    %c0_i32_1 = arith.constant 0 : i32
    return %c0_i32, %c0_i32_0 : i32, i32
  }
  func.func @transform_10(%arg0: i32) -> (i32, i32) {
    %c0_i32 = arith.constant 0 : i32
    %c0_i32_0 = arith.constant 0 : i32
    %c0_i32_1 = arith.constant 0 : i32
    return %c0_i32, %c0_i32_0 : i32, i32
  }
  func.func @transform_11(%arg0: i32) -> (i32, i32) {
    %c0_i32 = arith.constant 0 : i32
    %c0_i32_0 = arith.constant 0 : i32
    %c0_i32_1 = arith.constant 0 : i32
    return %c0_i32, %c0_i32_0 : i32, i32
  }
  func.func @transform_12(%arg0: i32) -> (i32, i32) {
    %c0_i32 = arith.constant 0 : i32
    %c0_i32_0 = arith.constant 0 : i32
    %c0_i32_1 = arith.constant 0 : i32
    return %c0_i32, %c0_i32_0 : i32, i32
  }
  func.func @transform_13(%arg0: i32) -> (i32, i32) {
    %c0_i32 = arith.constant 0 : i32
    %c0_i32_0 = arith.constant 0 : i32
    %c0_i32_1 = arith.constant 0 : i32
    return %c0_i32, %c0_i32_0 : i32, i32
  }
  func.func @transform_14(%arg0: i32) -> (i32, i32) {
    %c0_i32 = arith.constant 0 : i32
    %c0_i32_0 = arith.constant 0 : i32
    return %c0_i32, %arg0 : i32, i32
  }
}

</mosaic_0001>

<llo_original>
// kernel: tower_collection_forward.1
$region0: #{tower_collection_forward.1}
  #allocation0 [shape = 'u32[]', space=smem, size = 0x4, offset = 0x4, fixed_abs, tag = 'smem constant byte address 0x4 - core index']
  #allocation1 [shape = 'u32[144,128]{1,0:T(1,128)}', space=vmem, size = 0x12000, scoped, tag = 'internal scratch']
  %s0 = inlined_call_operand.vmem [shape: f32[16,256], index: 0, kind: input, shape index: {}]
  %s1 = inlined_call_operand.vmem [shape: f32[16,256], index: 1, kind: input, shape index: {}]
  %s2 = inlined_call_operand.vmem [shape: f32[8,256], index: 2, kind: input, shape index: {}]
  %s3 = inlined_call_operand.vmem [shape: f32[8,256], index: 3, kind: input, shape index: {}]
  %s4 = inlined_call_operand.vmem [shape: f32[8,16], index: 4, kind: input, shape index: {}]
  %s5 = inlined_call_operand.vmem [shape: f32[8,1], index: 5, kind: input, shape index: {}]
  %s6 = inlined_call_operand.vmem [shape: f32[16,16], index: 6, kind: input, shape index: {}]
  %s7 = inlined_call_operand.vmem [shape: f32[16,1], index: 7, kind: input, shape index: {}]
  %s8 = inlined_call_operand.vmem [shape: f32[8,8], index: 8, kind: input, shape index: {}]
  %s9 = inlined_call_operand.vmem [shape: f32[8,1], index: 9, kind: input, shape index: {}]
  %s10 = inlined_call_operand.vmem [shape: f32[8,8], index: 10, kind: input, shape index: {}]
  %s11 = inlined_call_operand.vmem [shape: f32[8,1], index: 11, kind: input, shape index: {}]
  %s12 = inlined_call_operand.vmem [shape: f32[16,40], index: 12, kind: input, shape index: {}]
  %s13 = inlined_call_operand.vmem [shape: f32[16,1], index: 13, kind: input, shape index: {}]
  %s14 = inlined_call_operand.hbm [shape: f32[1,256], index: 14, kind: output, shape index: {}]
  %s15 = sld [smem:[#allocation0]]
  $region165: #{tower_collection_forward.1} parent=0
    _
  %s17 = ssub.s32 1, %s15
  %s18 = scalar_select 0, %s17, %s15
  $region1: #{tower_collection_forward.1} parent=0
    #allocation2 [shape = 'u8[16384]{0}', space=vmem, size = 0x4000, scoped, tag = 'input window, operand 0']
    #allocation3 [shape = 'u8[16384]{0}', space=vmem, size = 0x4000, scoped, tag = 'input window, operand 1']
    #allocation4 [shape = 'u8[1024]{0}', space=vmem, size = 0x400, scoped, tag = 'output window, operand 0']
    #allocation5 [shape = 's32[2]{0}', space=sflag, size = 0x8, scoped, tag = 'scoped memory for tower_collection_forward.1']
    %19 = vsyncpa [#allocation5], 0
    %s20 = scalar_lea.sflag [#allocation5], 1
    %21 = vsyncpa %s20, 0
    loop: start=0, step=1, limit=4
    $region2: #{tower_collection_forward.1} parent=1 // loop_pre_header
      _
    $region3: #{tower_collection_forward.1} parent=1 // loop_header
      %s23 = sphi 0, %s27
      %p24 = scmp.ge.s32.totalorder %s23, 4
      %s33 = sphi 0, %s35
      %s36 = sphi 0, %s33
      %s37 = sphi 0, %s36
      %s53 = sphi 0, %s37
      %s59 = sphi 0, %s61
      %s62 = sphi 0, %s59
      %s63 = sphi 0, %s62
      %s79 = sphi 0, %s63
      %s85 = sphi 0, %s87
      %s88 = sphi 0, %s85
      %s89 = sphi 0, %s88
      %s105 = sphi 0, %s89
      %s111 = sphi 0, %s113
      %s114 = sphi 0, %s111
      %s115 = sphi 0, %s114
      %s131 = sphi 0, %s115
      %s135 = sphi 0, %s135
      %s137 = sphi 0, %s135
      %s138 = sphi 0, %s137
      %s152 = sphi 0, %s138
      %s156 = sphi 0, %s156
      %s158 = sphi 0, %s156
      %s159 = sphi 0, %s158
      %s173 = sphi 0, %s159
      %s177 = sphi 0, %s177
      %s179 = sphi 0, %s177
      %s180 = sphi 0, %s179
      %s194 = sphi 0, %s180
      %s198 = sphi 0, %s198
      %s200 = sphi 0, %s198
      %s201 = sphi 0, %s200
      %s215 = sphi 0, %s201
      %s219 = sphi 0, %s219
      %s221 = sphi 0, %s219
      %s222 = sphi 0, %s221
      %s236 = sphi 0, %s222
      %s240 = sphi 0, %s240
      %s242 = sphi 0, %s240
      %s243 = sphi 0, %s242
      %s257 = sphi 0, %s243
      %s261 = sphi 0, %s261
      %s263 = sphi 0, %s261
      %s264 = sphi 0, %s263
      %s278 = sphi 0, %s264
      %s282 = sphi 0, %s282
      %s284 = sphi 0, %s282
      %s285 = sphi 0, %s284
      %s299 = sphi 0, %s285
      %s303 = sphi 0, %s303
      %s305 = sphi 0, %s303
      %s306 = sphi 0, %s305
      %s320 = sphi 0, %s306
      %s324 = sphi 0, %s324
      %s326 = sphi 0, %s324
      %s327 = sphi 0, %s326
      %s341 = sphi 0, %s327
      %s347 = sphi 0, %s349
      %s350 = sphi 0, %s347
      %s351 = sphi 0, %s350
      %s367 = sphi 0, %s351
    $region4: #{tower_collection_forward.1} parent=1 // loop_header_branch
      %26 = sbr.rel (%p24) target = $region8
    $region5: #{tower_collection_forward.1} parent=1 // loop_body
      %s28 = ssub.s32 %s23, 1
      %s29 = ssub.s32 %s23, 2
      %s30 = sadd.s32 %s23, 1
      %s31 = ssub.s32 %s23, %s30
      %p32 = scmp.eq.s32.totalorder %s31, 0
      %s34 = sadd.s32 %s33, 1
      %s35 = scalar_select %p32, %s33, %s34
      %p38 = pneg %p32
      %p39 = scmp.eq.s32.totalorder %s23, 1
      %p40 = por %p38, %p39
      %p41 = scmp.ne.s32.totalorder %s33, %s36
      %p42 = scmp.eq.s32.totalorder %s23, 0
      %p43 = por %p41, %p42
      %p44 = scmp.ne.s32.totalorder %s33, %s36
      %p45 = scmp.eq.s32.totalorder %s28, 1
      %p46 = por %p44, %p45
      %p47 = scmp.ne.s32.totalorder %s36, %s37
      %p48 = scmp.eq.s32.totalorder %s28, 0
      %p49 = por %p47, %p48
      %p50 = scmp.ne.s32.totalorder %s36, %s37
      %p51 = scmp.eq.s32.totalorder %s29, 1
      %p52 = por %p50, %p51
      %p54 = scmp.ne.s32.totalorder %s37, %s53
      %p55 = scmp.eq.s32.totalorder %s29, 0
      %p56 = por %p54, %p55
      %s57 = ssub.s32 %s23, %s30
      %p58 = scmp.eq.s32.totalorder %s57, 0
      %s60 = sadd.s32 %s59, 1
      %s61 = scalar_select %p58, %s59, %s60
      %p64 = pneg %p58
      %p65 = scmp.eq.s32.totalorder %s23, 1
      %p66 = por %p64, %p65
      %p67 = scmp.ne.s32.totalorder %s59, %s62
      %p68 = scmp.eq.s32.totalorder %s23, 0
      %p69 = por %p67, %p68
      %p70 = scmp.ne.s32.totalorder %s59, %s62
      %p71 = scmp.eq.s32.totalorder %s28, 1
      %p72 = por %p70, %p71
      %p73 = scmp.ne.s32.totalorder %s62, %s63
      %p74 = scmp.eq.s32.totalorder %s28, 0
      %p75 = por %p73, %p74
      %p76 = scmp.ne.s32.totalorder %s62, %s63
      %p77 = scmp.eq.s32.totalorder %s29, 1
      %p78 = por %p76, %p77
      %p80 = scmp.ne.s32.totalorder %s63, %s79
      %p81 = scmp.eq.s32.totalorder %s29, 0
      %p82 = por %p80, %p81
      %s83 = ssub.s32 %s23, %s30
      %p84 = scmp.eq.s32.totalorder %s83, 0
      %s86 = sadd.s32 %s85, 1
      %s87 = scalar_select %p84, %s85, %s86
      %p90 = pneg %p84
      %p91 = scmp.eq.s32.totalorder %s23, 1
      %p92 = por %p90, %p91
      %p93 = scmp.ne.s32.totalorder %s85, %s88
      %p94 = scmp.eq.s32.totalorder %s23, 0
      %p95 = por %p93, %p94
      %p96 = scmp.ne.s32.totalorder %s85, %s88
      %p97 = scmp.eq.s32.totalorder %s28, 1
      %p98 = por %p96, %p97
      %p99 = scmp.ne.s32.totalorder %s88, %s89
      %p100 = scmp.eq.s32.totalorder %s28, 0
      %p101 = por %p99, %p100
      %p102 = scmp.ne.s32.totalorder %s88, %s89
      %p103 = scmp.eq.s32.totalorder %s29, 1
      %p104 = por %p102, %p103
      %p106 = scmp.ne.s32.totalorder %s89, %s105
      %p107 = scmp.eq.s32.totalorder %s29, 0
      %p108 = por %p106, %p107
      %s109 = ssub.s32 %s23, %s30
      %p110 = scmp.eq.s32.totalorder %s109, 0
      %s112 = sadd.s32 %s111, 1
      %s113 = scalar_select %p110, %s111, %s112
      %p116 = pneg %p110
      %p117 = scmp.eq.s32.totalorder %s23, 1
      %p118 = por %p116, %p117
      %p119 = scmp.ne.s32.totalorder %s111, %s114
      %p120 = scmp.eq.s32.totalorder %s23, 0
      %p121 = por %p119, %p120
      %p122 = scmp.ne.s32.totalorder %s111, %s114
      %p123 = scmp.eq.s32.totalorder %s28, 1
      %p124 = por %p122, %p123
      %p125 = scmp.ne.s32.totalorder %s114, %s115
      %p126 = scmp.eq.s32.totalorder %s28, 0
      %p127 = por %p125, %p126
      %p128 = scmp.ne.s32.totalorder %s114, %s115
      %p129 = scmp.eq.s32.totalorder %s29, 1
      %p130 = por %p128, %p129
      %p132 = scmp.ne.s32.totalorder %s115, %s131
      %p133 = scmp.eq.s32.totalorder %s29, 0
      %p134 = por %p132, %p133
      %s136 = sadd.s32 %s135, 1
      %p139 = scmp.eq.s32.totalorder %s23, 1
      %p140 = scmp.ne.s32.totalorder %s135, %s137
      %p141 = scmp.eq.s32.totalorder %s23, 0
      %p142 = por %p140, %p141
      %p143 = scmp.ne.s32.totalorder %s135, %s137
      %p144 = scmp.eq.s32.totalorder %s28, 1
      %p145 = por %p143, %p144
      %p146 = scmp.ne.s32.totalorder %s137, %s138
      %p147 = scmp.eq.s32.totalorder %s28, 0
      %p148 = por %p146, %p147
      %p149 = scmp.ne.s32.totalorder %s137, %s138
      %p150 = scmp.eq.s32.totalorder %s29, 1
      %p151 = por %p149, %p150
      %p153 = scmp.ne.s32.totalorder %s138, %s152
      %p154 = scmp.eq.s32.totalorder %s29, 0
      %p155 = por %p153, %p154
      %s157 = sadd.s32 %s156, 1
      %p160 = scmp.eq.s32.totalorder %s23, 1
      %p161 = scmp.ne.s32.totalorder %s156, %s158
      %p162 = scmp.eq.s32.totalorder %s23, 0
      %p163 = por %p161, %p162
      %p164 = scmp.ne.s32.totalorder %s156, %s158
      %p165 = scmp.eq.s32.totalorder %s28, 1
      %p166 = por %p164, %p165
      %p167 = scmp.ne.s32.totalorder %s158, %s159
      %p168 = scmp.eq.s32.totalorder %s28, 0
      %p169 = por %p167, %p168
      %p170 = scmp.ne.s32.totalorder %s158, %s159
      %p171 = scmp.eq.s32.totalorder %s29, 1
      %p172 = por %p170, %p171
      %p174 = scmp.ne.s32.totalorder %s159, %s173
      %p175 = scmp.eq.s32.totalorder %s29, 0
      %p176 = por %p174, %p175
      %s178 = sadd.s32 %s177, 1
      %p181 = scmp.eq.s32.totalorder %s23, 1
      %p182 = scmp.ne.s32.totalorder %s177, %s179
      %p183 = scmp.eq.s32.totalorder %s23, 0
      %p184 = por %p182, %p183
      %p185 = scmp.ne.s32.totalorder %s177, %s179
      %p186 = scmp.eq.s32.totalorder %s28, 1
      %p187 = por %p185, %p186
      %p188 = scmp.ne.s32.totalorder %s179, %s180
      %p189 = scmp.eq.s32.totalorder %s28, 0
      %p190 = por %p188, %p189
      %p191 = scmp.ne.s32.totalorder %s179, %s180
      %p192 = scmp.eq.s32.totalorder %s29, 1
      %p193 = por %p191, %p192
      %p195 = scmp.ne.s32.totalorder %s180, %s194
      %p196 = scmp.eq.s32.totalorder %s29, 0
      %p197 = por %p195, %p196
      %s199 = sadd.s32 %s198, 1
      %p202 = scmp.eq.s32.totalorder %s23, 1
      %p203 = scmp.ne.s32.totalorder %s198, %s200
      %p204 = scmp.eq.s32.totalorder %s23, 0
      %p205 = por %p203, %p204
      %p206 = scmp.ne.s32.totalorder %s198, %s200
      %p207 = scmp.eq.s32.totalorder %s28, 1
      %p208 = por %p206, %p207
      %p209 = scmp.ne.s32.totalorder %s200, %s201
      %p210 = scmp.eq.s32.totalorder %s28, 0
      %p211 = por %p209, %p210
      %p212 = scmp.ne.s32.totalorder %s200, %s201
      %p213 = scmp.eq.s32.totalorder %s29, 1
      %p214 = por %p212, %p213
      %p216 = scmp.ne.s32.totalorder %s201, %s215
      %p217 = scmp.eq.s32.totalorder %s29, 0
      %p218 = por %p216, %p217
      %s220 = sadd.s32 %s219, 1
      %p223 = scmp.eq.s32.totalorder %s23, 1
      %p224 = scmp.ne.s32.totalorder %s219, %s221
      %p225 = scmp.eq.s32.totalorder %s23, 0
      %p226 = por %p224, %p225
      %p227 = scmp.ne.s32.totalorder %s219, %s221
      %p228 = scmp.eq.s32.totalorder %s28, 1
      %p229 = por %p227, %p228
      %p230 = scmp.ne.s32.totalorder %s221, %s222
      %p231 = scmp.eq.s32.totalorder %s28, 0
      %p232 = por %p230, %p231
      %p233 = scmp.ne.s32.totalorder %s221, %s222
      %p234 = scmp.eq.s32.totalorder %s29, 1
      %p235 = por %p233, %p234
      %p237 = scmp.ne.s32.totalorder %s222, %s236
      %p238 = scmp.eq.s32.totalorder %s29, 0
      %p239 = por %p237, %p238
      %s241 = sadd.s32 %s240, 1
      %p244 = scmp.eq.s32.totalorder %s23, 1
      %p245 = scmp.ne.s32.totalorder %s240, %s242
      %p246 = scmp.eq.s32.totalorder %s23, 0
      %p247 = por %p245, %p246
      %p248 = scmp.ne.s32.totalorder %s240, %s242
      %p249 = scmp.eq.s32.totalorder %s28, 1
      %p250 = por %p248, %p249
      %p251 = scmp.ne.s32.totalorder %s242, %s243
      %p252 = scmp.eq.s32.totalorder %s28, 0
      %p253 = por %p251, %p252
      %p254 = scmp.ne.s32.totalorder %s242, %s243
      %p255 = scmp.eq.s32.totalorder %s29, 1
      %p256 = por %p254, %p255
      %p258 = scmp.ne.s32.totalorder %s243, %s257
      %p259 = scmp.eq.s32.totalorder %s29, 0
      %p260 = por %p258, %p259
      %s262 = sadd.s32 %s261, 1
      %p265 = scmp.eq.s32.totalorder %s23, 1
      %p266 = scmp.ne.s32.totalorder %s261, %s263
      %p267 = scmp.eq.s32.totalorder %s23, 0
      %p268 = por %p266, %p267
      %p269 = scmp.ne.s32.totalorder %s261, %s263
      %p270 = scmp.eq.s32.totalorder %s28, 1
      %p271 = por %p269, %p270
      %p272 = scmp.ne.s32.totalorder %s263, %s264
      %p273 = scmp.eq.s32.totalorder %s28, 0
      %p274 = por %p272, %p273
      %p275 = scmp.ne.s32.totalorder %s263, %s264
      %p276 = scmp.eq.s32.totalorder %s29, 1
      %p277 = por %p275, %p276
      %p279 = scmp.ne.s32.totalorder %s264, %s278
      %p280 = scmp.eq.s32.totalorder %s29, 0
      %p281 = por %p279, %p280
      %s283 = sadd.s32 %s282, 1
      %p286 = scmp.eq.s32.totalorder %s23, 1
      %p287 = scmp.ne.s32.totalorder %s282, %s284
      %p288 = scmp.eq.s32.totalorder %s23, 0
      %p289 = por %p287, %p288
      %p290 = scmp.ne.s32.totalorder %s282, %s284
      %p291 = scmp.eq.s32.totalorder %s28, 1
      %p292 = por %p290, %p291
      %p293 = scmp.ne.s32.totalorder %s284, %s285
      %p294 = scmp.eq.s32.totalorder %s28, 0
      %p295 = por %p293, %p294
      %p296 = scmp.ne.s32.totalorder %s284, %s285
      %p297 = scmp.eq.s32.totalorder %s29, 1
      %p298 = por %p296, %p297
      %p300 = scmp.ne.s32.totalorder %s285, %s299
      %p301 = scmp.eq.s32.totalorder %s29, 0
      %p302 = por %p300, %p301
      %s304 = sadd.s32 %s303, 1
      %p307 = scmp.eq.s32.totalorder %s23, 1
      %p308 = scmp.ne.s32.totalorder %s303, %s305
      %p309 = scmp.eq.s32.totalorder %s23, 0
      %p310 = por %p308, %p309
      %p311 = scmp.ne.s32.totalorder %s303, %s305
      %p312 = scmp.eq.s32.totalorder %s28, 1
      %p313 = por %p311, %p312
      %p314 = scmp.ne.s32.totalorder %s305, %s306
      %p315 = scmp.eq.s32.totalorder %s28, 0
      %p316 = por %p314, %p315
      %p317 = scmp.ne.s32.totalorder %s305, %s306
      %p318 = scmp.eq.s32.totalorder %s29, 1
      %p319 = por %p317, %p318
      %p321 = scmp.ne.s32.totalorder %s306, %s320
      %p322 = scmp.eq.s32.totalorder %s29, 0
      %p323 = por %p321, %p322
      %s325 = sadd.s32 %s324, 1
      %p328 = scmp.eq.s32.totalorder %s23, 1
      %p329 = scmp.ne.s32.totalorder %s324, %s326
      %p330 = scmp.eq.s32.totalorder %s23, 0
      %p331 = por %p329, %p330
      %p332 = scmp.ne.s32.totalorder %s324, %s326
      %p333 = scmp.eq.s32.totalorder %s28, 1
      %p334 = por %p332, %p333
      %p335 = scmp.ne.s32.totalorder %s326, %s327
      %p336 = scmp.eq.s32.totalorder %s28, 0
      %p337 = por %p335, %p336
      %p338 = scmp.ne.s32.totalorder %s326, %s327
      %p339 = scmp.eq.s32.totalorder %s29, 1
      %p340 = por %p338, %p339
      %p342 = scmp.ne.s32.totalorder %s327, %s341
      %p343 = scmp.eq.s32.totalorder %s29, 0
      %p344 = por %p342, %p343
      %s345 = ssub.s32 %s23, %s30
      %p346 = scmp.eq.s32.totalorder %s345, 0
      %s348 = sadd.s32 %s347, 1
      %s349 = scalar_select %p346, %s347, %s348
      %p352 = pneg %p346
      %p353 = scmp.eq.s32.totalorder %s23, 1
      %p354 = por %p352, %p353
      %p355 = scmp.ne.s32.totalorder %s347, %s350
      %p356 = scmp.eq.s32.totalorder %s23, 0
      %p357 = por %p355, %p356
      %p358 = scmp.ne.s32.totalorder %s347, %s350
      %p359 = scmp.eq.s32.totalorder %s28, 1
      %p360 = por %p358, %p359
      %p361 = scmp.ne.s32.totalorder %s350, %s351
      %p362 = scmp.eq.s32.totalorder %s28, 0
      %p363 = por %p361, %p362
      %p364 = scmp.ne.s32.totalorder %s350, %s351
      %p365 = scmp.eq.s32.totalorder %s29, 1
      %p366 = por %p364, %p365
      %p368 = scmp.ne.s32.totalorder %s351, %s367
      %p369 = scmp.eq.s32.totalorder %s29, 0
      %p370 = por %p368, %p369
      %p371 = scmp.le.s32.totalorder 1, %s23
      %p372 = scmp.lt.s32.totalorder %s23, 3
      %p373 = pnand %p371, %p372
      %p374 = pneg %p373
      // Predicated region
      $region9: #{tower_collection_forward.1} parent=5 // pred_check
        _
      $region10: #{tower_collection_forward.1} parent=5 // pred_check_branch
        %376 = sbr.rel (%p373) target = $region12
      $region11: #{tower_collection_forward.1} parent=5 // pred_region
        %s377 = ssub.s32 %s23, 1
        // Predicated region
        $region13: #{tower_collection_forward.1} parent=11 // pred_check
          %p378 = pneg %p148
        $region14: #{tower_collection_forward.1} parent=11 // pred_check_branch
          %380 = sbr.rel (%p378) target = $region16
        $region15: #{tower_collection_forward.1} parent=11 // pred_region
          _
        $region16: #{tower_collection_forward.1} parent=11 // pred_fallthru
          _
        // Predicated region
        $region17: #{tower_collection_forward.1} parent=11 // pred_check
          %p381 = pneg %p169
        $region18: #{tower_collection_forward.1} parent=11 // pred_check_branch
          %383 = sbr.rel (%p381) target = $region20
        $region19: #{tower_collection_forward.1} parent=11 // pred_region
          _
        $region20: #{tower_collection_forward.1} parent=11 // pred_fallthru
          _
        // Predicated region
        $region21: #{tower_collection_forward.1} parent=11 // pred_check
          %p384 = pneg %p190
        $region22: #{tower_collection_forward.1} parent=11 // pred_check_branch
          %386 = sbr.rel (%p384) target = $region24
        $region23: #{tower_collection_forward.1} parent=11 // pred_region
          _
        $region24: #{tower_collection_forward.1} parent=11 // pred_fallthru
          _
        // Predicated region
        $region25: #{tower_collection_forward.1} parent=11 // pred_check
          %p387 = pneg %p211
        $region26: #{tower_collection_forward.1} parent=11 // pred_check_branch
          %389 = sbr.rel (%p387) target = $region28
        $region27: #{tower_collection_forward.1} parent=11 // pred_region
          _
        $region28: #{tower_collection_forward.1} parent=11 // pred_fallthru
          _
        // Predicated region
        $region29: #{tower_collection_forward.1} parent=11 // pred_check
          %p390 = pneg %p232
        $region30: #{tower_collection_forward.1} parent=11 // pred_check_branch
          %392 = sbr.rel (%p390) target = $region32
        $region31: #{tower_collection_forward.1} parent=11 // pred_region
          _
        $region32: #{tower_collection_forward.1} parent=11 // pred_fallthru
          _
        // Predicated region
        $region33: #{tower_collection_forward.1} parent=11 // pred_check
          %p393 = pneg %p253
        $region34: #{tower_collection_forward.1} parent=11 // pred_check_branch
          %395 = sbr.rel (%p393) target = $region36
        $region35: #{tower_collection_forward.1} parent=11 // pred_region
          _
        $region36: #{tower_collection_forward.1} parent=11 // pred_fallthru
          _
        // Predicated region
        $region37: #{tower_collection_forward.1} parent=11 // pred_check
          %p396 = pneg %p274
        $region38: #{tower_collection_forward.1} parent=11 // pred_check_branch
          %398 = sbr.rel (%p396) target = $region40
        $region39: #{tower_collection_forward.1} parent=11 // pred_region
          _
        $region40: #{tower_collection_forward.1} parent=11 // pred_fallthru
          _
        // Predicated region
        $region41: #{tower_collection_forward.1} parent=11 // pred_check
          %p399 = pneg %p295
        $region42: #{tower_collection_forward.1} parent=11 // pred_check_branch
          %401 = sbr.rel (%p399) target = $region44
        $region43: #{tower_collection_forward.1} parent=11 // pred_region
          _
        $region44: #{tower_collection_forward.1} parent=11 // pred_fallthru
          _
        // Predicated region
        $region45: #{tower_collection_forward.1} parent=11 // pred_check
          %p402 = pneg %p316
        $region46: #{tower_collection_forward.1} parent=11 // pred_check_branch
          %404 = sbr.rel (%p402) target = $region48
        $region47: #{tower_collection_forward.1} parent=11 // pred_region
          _
        $region48: #{tower_collection_forward.1} parent=11 // pred_fallthru
          _
        // Predicated region
        $region49: #{tower_collection_forward.1} parent=11 // pred_check
          %p405 = pneg %p337
        $region50: #{tower_collection_forward.1} parent=11 // pred_check_branch
          %407 = sbr.rel (%p405) target = $region52
        $region51: #{tower_collection_forward.1} parent=11 // pred_region
          _
        $region52: #{tower_collection_forward.1} parent=11 // pred_fallthru
          _
      $region12: #{tower_collection_forward.1} parent=5 // pred_fallthru
        _
      %p408 = scmp.lt.s32.totalorder %s23, 2
      // Predicated region
      $region53: #{tower_collection_forward.1} parent=5 // pred_check
        %p409 = pneg %p408
      $region54: #{tower_collection_forward.1} parent=5 // pred_check_branch
        %411 = sbr.rel (%p409) target = $region56
      $region55: #{tower_collection_forward.1} parent=5 // pred_region
        // Predicated region
        $region57: #{tower_collection_forward.1} parent=55 // pred_check
          %p412 = pneg %p43
        $region58: #{tower_collection_forward.1} parent=55 // pred_check_branch
          %414 = sbr.rel (%p412) target = $region60
        $region59: #{tower_collection_forward.1} parent=55 // pred_region
          %s415 = sand.u32 %s33, 1
          %s416 = sand.u32 %s33, 1
          %s417 = smul.addr %s416, 16
          %s418 = scalar_lea.vmem [#allocation2], %s417
          %s419 = smul.addr %s23, 8
          %s420 = scalar_lea.vmem %s0, %s419
          // Predicated region
          $region61: #{tower_collection_forward.1} parent=59 // pred_check
            _
          $region62: #{tower_collection_forward.1} parent=59 // pred_check_branch
            %422 = sbr.rel (0) target = $region64
          $region63: #{tower_collection_forward.1} parent=59 // pred_region
            // Predicated region
            $region65: #{tower_collection_forward.1} parent=63 // pred_check
              _
            $region66: #{tower_collection_forward.1} parent=63 // pred_check_branch
              %424 = sbr.rel (0) target = $region68
            $region67: #{tower_collection_forward.1} parent=63 // pred_region
              // Predicated region
              $region80: #{tower_collection_forward.1} parent=67 // pred_check
                _
              $region81: #{tower_collection_forward.1} parent=67 // pred_check_branch
                %441 = sbr.rel (0) target = $region83
              $region82: #{tower_collection_forward.1} parent=67 // pred_region
                loop: start=0, step=1, limit=1
                $region84: #{tower_collection_forward.1} parent=82 // loop_pre_header
                  _
                $region85: #{tower_collection_forward.1} parent=82 // loop_header
                  %s443 = sphi 0, %s447
                  %p444 = scmp.ge.s32.totalorder %s443, 1
                  %s448 = sphi %s420, %s420
                  %s449 = sphi %s418, %s418
                $region86: #{tower_collection_forward.1} parent=82 // loop_header_branch
                  %446 = sbr.rel (%p444) target = $region90
                $region87: #{tower_collection_forward.1} parent=82 // loop_body
                  %v450 = vld [vmem:[%s448] sm:$0xff]
                  %451 = vst [vmem:[%s449] sm:$0xff] %v450
                  %v452 = vld [vmem:[%s448 + $0x10] sm:$0xff]
                  %453 = vst [vmem:[%s449 + $0x8] sm:$0xff] %v452
                $region88: #{tower_collection_forward.1} parent=82 // loop_footer
                  %s447 = sadd.s32 1, %s443
                $region89: #{tower_collection_forward.1} parent=82 // loop_footer_branch
                  %442 = sbr.rel target = $region85
                $region90: #{tower_collection_forward.1} parent=82 // loop_exit
                  _
              $region83: #{tower_collection_forward.1} parent=67 // pred_fallthru
                _
              // Predicated region
              $region91: #{tower_collection_forward.1} parent=67 // pred_check
                _
              $region92: #{tower_collection_forward.1} parent=67 // pred_check_branch
                %455 = sbr.rel target = $region94
              $region93: #{tower_collection_forward.1} parent=67 // pred_region
                _
              $region94: #{tower_collection_forward.1} parent=67 // pred_fallthru
                _
            $region68: #{tower_collection_forward.1} parent=63 // pred_fallthru
              _
            // Predicated region
            $region69: #{tower_collection_forward.1} parent=63 // pred_check
              _
            $region70: #{tower_collection_forward.1} parent=63 // pred_check_branch
              %426 = sbr.rel target = $region72
            $region71: #{tower_collection_forward.1} parent=63 // pred_region
              loop: start=0, step=1, limit=1
              $region73: #{tower_collection_forward.1} parent=71 // loop_pre_header
                _
              $region74: #{tower_collection_forward.1} parent=71 // loop_header
                %s429 = sphi 0, %s433
                %p430 = scmp.ge.s32.totalorder %s429, 1
                %s434 = sphi %s420, %s420
                %s435 = sphi %s418, %s418
              $region75: #{tower_collection_forward.1} parent=71 // loop_header_branch
                %432 = sbr.rel (%p430) target = $region79
              $region76: #{tower_collection_forward.1} parent=71 // loop_body
                %v436 = vld [vmem:[%s434] sm:$0xff]
                %437 = vst [vmem:[%s435] sm:$0xff] %v436
                %v438 = vld [vmem:[%s434 + $0x10] sm:$0xff]
                %439 = vst [vmem:[%s435 + $0x8] sm:$0xff] %v438
              $region77: #{tower_collection_forward.1} parent=71 // loop_footer
                %s433 = sadd.s32 1, %s429
              $region78: #{tower_collection_forward.1} parent=71 // loop_footer_branch
                %428 = sbr.rel target = $region74
              $region79: #{tower_collection_forward.1} parent=71 // loop_exit
                _
            $region72: #{tower_collection_forward.1} parent=63 // pred_fallthru
              _
          $region64: #{tower_collection_forward.1} parent=59 // pred_fallthru
            _
          %456 = vnop
        $region60: #{tower_collection_forward.1} parent=55 // pred_fallthru
          _
        // Predicated region
        $region95: #{tower_collection_forward.1} parent=55 // pred_check
          %p457 = pneg %p69
        $region96: #{tower_collection_forward.1} parent=55 // pred_check_branch
          %459 = sbr.rel (%p457) target = $region98
        $region97: #{tower_collection_forward.1} parent=55 // pred_region
          %s460 = sand.u32 %s59, 1
          %s461 = sand.u32 %s59, 1
          %s462 = smul.addr %s461, 16
          %s463 = scalar_lea.vmem [#allocation3], %s462
          %s464 = smul.addr %s23, 8
          %s465 = scalar_lea.vmem %s1, %s464
          // Predicated region
          $region99: #{tower_collection_forward.1} parent=97 // pred_check
            _
          $region100: #{tower_collection_forward.1} parent=97 // pred_check_branch
            %467 = sbr.rel (0) target = $region102
          $region101: #{tower_collection_forward.1} parent=97 // pred_region
            // Predicated region
            $region103: #{tower_collection_forward.1} parent=101 // pred_check
              _
            $region104: #{tower_collection_forward.1} parent=101 // pred_check_branch
              %469 = sbr.rel (0) target = $region106
            $region105: #{tower_collection_forward.1} parent=101 // pred_region
              // Predicated region
              $region118: #{tower_collection_forward.1} parent=105 // pred_check
                _
              $region119: #{tower_collection_forward.1} parent=105 // pred_check_branch
                %486 = sbr.rel (0) target = $region121
              $region120: #{tower_collection_forward.1} parent=105 // pred_region
                loop: start=0, step=1, limit=1
                $region122: #{tower_collection_forward.1} parent=120 // loop_pre_header
                  _
                $region123: #{tower_collection_forward.1} parent=120 // loop_header
                  %s488 = sphi 0, %s492
                  %p489 = scmp.ge.s32.totalorder %s488, 1
                  %s493 = sphi %s465, %s465
                  %s494 = sphi %s463, %s463
                $region124: #{tower_collection_forward.1} parent=120 // loop_header_branch
                  %491 = sbr.rel (%p489) target = $region128
                $region125: #{tower_collection_forward.1} parent=120 // loop_body
                  %v495 = vld [vmem:[%s493] sm:$0xff]
                  %496 = vst [vmem:[%s494] sm:$0xff] %v495
                  %v497 = vld [vmem:[%s493 + $0x10] sm:$0xff]
                  %498 = vst [vmem:[%s494 + $0x8] sm:$0xff] %v497
                $region126: #{tower_collection_forward.1} parent=120 // loop_footer
                  %s492 = sadd.s32 1, %s488
                $region127: #{tower_collection_forward.1} parent=120 // loop_footer_branch
                  %487 = sbr.rel target = $region123
                $region128: #{tower_collection_forward.1} parent=120 // loop_exit
                  _
              $region121: #{tower_collection_forward.1} parent=105 // pred_fallthru
                _
              // Predicated region
              $region129: #{tower_collection_forward.1} parent=105 // pred_check
                _
              $region130: #{tower_collection_forward.1} parent=105 // pred_check_branch
                %500 = sbr.rel target = $region132
              $region131: #{tower_collection_forward.1} parent=105 // pred_region
                _
              $region132: #{tower_collection_forward.1} parent=105 // pred_fallthru
                _
            $region106: #{tower_collection_forward.1} parent=101 // pred_fallthru
              _
            // Predicated region
            $region107: #{tower_collection_forward.1} parent=101 // pred_check
              _
            $region108: #{tower_collection_forward.1} parent=101 // pred_check_branch
              %471 = sbr.rel target = $region110
            $region109: #{tower_collection_forward.1} parent=101 // pred_region
              loop: start=0, step=1, limit=1
              $region111: #{tower_collection_forward.1} parent=109 // loop_pre_header
                _
              $region112: #{tower_collection_forward.1} parent=109 // loop_header
                %s474 = sphi 0, %s478
                %p475 = scmp.ge.s32.totalorder %s474, 1
                %s479 = sphi %s465, %s465
                %s480 = sphi %s463, %s463
              $region113: #{tower_collection_forward.1} parent=109 // loop_header_branch
                %477 = sbr.rel (%p475) target = $region117
              $region114: #{tower_collection_forward.1} parent=109 // loop_body
                %v481 = vld [vmem:[%s479] sm:$0xff]
                %482 = vst [vmem:[%s480] sm:$0xff] %v481
                %v483 = vld [vmem:[%s479 + $0x10] sm:$0xff]
                %484 = vst [vmem:[%s480 + $0x8] sm:$0xff] %v483
              $region115: #{tower_collection_forward.1} parent=109 // loop_footer
                %s478 = sadd.s32 1, %s474
              $region116: #{tower_collection_forward.1} parent=109 // loop_footer_branch
                %473 = sbr.rel target = $region112
              $region117: #{tower_collection_forward.1} parent=109 // loop_exit
                _
            $region110: #{tower_collection_forward.1} parent=101 // pred_fallthru
              _
          $region102: #{tower_collection_forward.1} parent=97 // pred_fallthru
            _
          %501 = vnop
        $region98: #{tower_collection_forward.1} parent=55 // pred_fallthru
          _
        // Predicated region
        $region133: #{tower_collection_forward.1} parent=55 // pred_check
          %p502 = pneg %p95
        $region134: #{tower_collection_forward.1} parent=55 // pred_check_branch
          %504 = sbr.rel (%p502) target = $region136
        $region135: #{tower_collection_forward.1} parent=55 // pred_region
          %p505 = scmp.lt.s32.totalorder %s23, 1
          %s506 = scalar_select %p505, %s23, 1
          %s507 = smul.addr %s506, 8
          %s508 = scalar_lea.vmem %s2, %s507
        $region136: #{tower_collection_forward.1} parent=55 // pred_fallthru
          _
        // Predicated region
        $region137: #{tower_collection_forward.1} parent=55 // pred_check
          %p509 = pneg %p121
        $region138: #{tower_collection_forward.1} parent=55 // pred_check_branch
          %511 = sbr.rel (%p509) target = $region140
        $region139: #{tower_collection_forward.1} parent=55 // pred_region
          %p512 = scmp.lt.s32.totalorder %s23, 1
          %s513 = scalar_select %p512, %s23, 1
          %s514 = smul.addr %s513, 8
          %s515 = scalar_lea.vmem %s3, %s514
        $region140: #{tower_collection_forward.1} parent=55 // pred_fallthru
          _
      $region56: #{tower_collection_forward.1} parent=5 // pred_fallthru
        _
      %p516 = scmp.le.s32.totalorder 1, %s23
      %p517 = scmp.lt.s32.totalorder %s23, 3
      %p518 = pnand %p516, %p517
      %p519 = pneg %p518
      // Predicated region
      $region141: #{tower_collection_forward.1} parent=5 // pred_check
        _
      $region142: #{tower_collection_forward.1} parent=5 // pred_check_branch
        %521 = sbr.rel (%p518) target = $region144
      $region143: #{tower_collection_forward.1} parent=5 // pred_region
        %s522 = ssub.s32 %s23, 1
        %s523 = sand.u32 %s36, 1
        %s524 = sand.u32 %s36, 1
        %s525 = smul.addr %s524, 16
        %s526 = scalar_lea.vmem [#allocation2], %s525
        // Predicated region
        $region145: #{tower_collection_forward.1} parent=143 // pred_check
          %p527 = pneg %p49
        $region146: #{tower_collection_forward.1} parent=143 // pred_check_branch
          %529 = sbr.rel (%p527) target = $region148
        $region147: #{tower_collection_forward.1} parent=143 // pred_region
          _
        $region148: #{tower_collection_forward.1} parent=143 // pred_fallthru
          _
        %s530 = sand.u32 %s62, 1
        %s531 = sand.u32 %s62, 1
        %s532 = smul.addr %s531, 16
        %s533 = scalar_lea.vmem [#allocation3], %s532
        // Predicated region
        $region149: #{tower_collection_forward.1} parent=143 // pred_check
          %p534 = pneg %p75
        $region150: #{tower_collection_forward.1} parent=143 // pred_check_branch
          %536 = sbr.rel (%p534) target = $region152
        $region151: #{tower_collection_forward.1} parent=143 // pred_region
          _
        $region152: #{tower_collection_forward.1} parent=143 // pred_fallthru
          _
        %s537 = sand.u32 %s36, 1
        %s538 = sand.u32 %s36, 1
        %s539 = smul.addr %s538, 16
        %s540 = scalar_lea.vmem [#allocation2], %s539
        %p541 = pneg %p49
        %p542 = pneg %p46
        %s543 = sand.u32 %s62, 1
        %s544 = sand.u32 %s62, 1
        %s545 = smul.addr %s544, 16
        %s546 = scalar_lea.vmem [#allocation3], %s545
        %p547 = pneg %p75
        %p548 = pneg %p72
        %p549 = scmp.lt.s32.totalorder %s28, 1
        %s550 = scalar_select %p549, %s28, 1
        %s551 = smul.addr %s550, 8
        %s552 = scalar_lea.vmem %s2, %s551
        %p553 = pneg %p101
        %p554 = pneg %p98
        %p555 = scmp.lt.s32.totalorder %s28, 1
        %s556 = scalar_select %p555, %s28, 1
        %s557 = smul.addr %s556, 8
        %s558 = scalar_lea.vmem %s3, %s557
        %p559 = pneg %p127
        %p560 = pneg %p124
        %p561 = pneg %p148
        %p562 = pneg %p145
        %p563 = pneg %p169
        %p564 = pneg %p166
        %p565 = pneg %p190
        %p566 = pneg %p187
        %p567 = pneg %p211
        %p568 = pneg %p208
        %p569 = pneg %p232
        %p570 = pneg %p229
        %p571 = pneg %p253
        %p572 = pneg %p250
        %p573 = pneg %p274
        %p574 = pneg %p271
        %p575 = pneg %p295
        %p576 = pneg %p292
        %p577 = pneg %p316
        %p578 = pneg %p313
        %p579 = pneg %p337
        %p580 = pneg %p334
        %p581 = pneg %p363
        %p582 = pneg %p360
        %s583 = sand.u32 %s350, 1
        %s584 = scalar_lea.sflag [#allocation5], %s583
        %s585 = sand.u32 %s350, 1
        %s586 = scalar_lea.vmem [#allocation4], %s585
        %p587 = scmp.lt.s32.totalorder %s28, 1
        %s588 = scalar_select %p587, %s28, 1
        %s589 = smul.addr %s588, 8
        %s590 = scalar_lea.vmem %s2, %s589
        %p591 = scmp.lt.s32.totalorder %s28, 1
        %s592 = scalar_select %p591, %s28, 1
        %s593 = smul.addr %s592, 8
        %s594 = scalar_lea.vmem %s3, %s593
        %v595 = vld [vmem:[%s4] sm:$0xff]
        %v596 = vld [vmem:[%s5] sm:$0xff]
        %v597 = vld [vmem:[%s526] sm:$0xff]
        %v598 = vld [vmem:[%s526 + $0x8] sm:$0xff]
        %600 = vset.pattern.permute.xlu0 0
        %601 = vperm.xlu0 %600, %v596
        %v602 = vpop.permute.xlu0 %601
        %vm604 = vcmask 130048
        %v606 = vsel %vm604, %v595, 0
        %608 = vmatprep.subr.mxu0 0.0
        %609 = vmatpush1.msra.mxu0 %v597
        %610 = vmatprep.subr.mxu0 0.0
        %611 = vmatpush1.msra.mxu0 %v598
        %612 = vmatprep.subr.mxu0 0.0
        %613 = vmatpush1.msra.mxu0 0.0
        %614 = vmatprep.subr.mxu0 0.0
        %615 = vmatpush1.msra.mxu0 0.0
        %616 = vmatprep.subr.mxu0 0.0
        %617 = vmatpush1.msra.mxu0 0.0
        %618 = vmatprep.subr.mxu0 0.0
        %619 = vmatpush1.msra.mxu0 0.0
        %620 = vmatprep.subr.mxu0 0.0
        %621 = vmatpush1.msra.mxu0 0.0
        %622 = vmatprep.subr.mxu0 0.0
        %623 = vmatpush1.msra.mxu0 0.0
        %624 = vmatprep.subr.mxu0 0.0
        %625 = vmatpush1.msra.mxu0 0.0
        %626 = vmatprep.subr.mxu0 0.0
        %627 = vmatpush1.msra.mxu0 0.0
        %628 = vmatprep.subr.mxu0 0.0
        %629 = vmatpush1.msra.mxu0 0.0
        %630 = vmatprep.subr.mxu0 0.0
        %631 = vmatpush1.msra.mxu0 0.0
        %632 = vmatprep.subr.mxu0 0.0
        %633 = vmatpush1.msra.mxu0 0.0
        %634 = vmatprep.subr.mxu0 0.0
        %635 = vmatpush1.msra.mxu0 0.0
        %636 = vmatprep.subr.mxu0 0.0
        %637 = vmatpush1.msra.mxu0 0.0
        %638 = vmatprep.subr.mxu0 0.0
        %639 = vmatpush1.msra.mxu0 0.0
        %640 = vmatprep.subr.mxu0 0.0
        %641 = vmatpush1.msra.mxu0 0.0
        %642 = vmatprep.subr.mxu0 0.0
        %643 = vmatpush1.msra.mxu0 0.0
        %644 = vmatprep.subr.mxu0 0.0
        %645 = vmatpush1.msra.mxu0 0.0
        %646 = vmatprep.subr.mxu0 0.0
        %647 = vmatpush1.msra.mxu0 0.0
        %648 = vmatprep.subr.mxu0 0.0
        %649 = vmatpush1.msra.mxu0 0.0
        %650 = vmatprep.subr.mxu0 0.0
        %651 = vmatpush1.msra.mxu0 0.0
        %652 = vmatprep.subr.mxu0 0.0
        %653 = vmatpush1.msra.mxu0 0.0
        %654 = vmatprep.subr.mxu0 0.0
        %655 = vmatpush1.msra.mxu0 0.0
        %656 = vmatprep.subr.mxu0 0.0
        %657 = vmatpush1.msra.mxu0 0.0
        %658 = vmatprep.subr.mxu0 0.0
        %659 = vmatpush1.msra.mxu0 0.0
        %660 = vmatprep.subr.mxu0 0.0
        %661 = vmatpush1.msra.mxu0 0.0
        %662 = vmatprep.subr.mxu0 0.0
        %663 = vmatpush1.msra.mxu0 0.0
        %664 = vmatprep.subr.mxu0 0.0
        %665 = vmatpush1.msra.mxu0 0.0
        %666 = vmatprep.subr.mxu0 0.0
        %667 = vmatpush1.msra.mxu0 0.0
        %668 = vmatprep.subr.mxu0 0.0
        %669 = vmatpush1.msra.mxu0 0.0
        %670 = vmatprep.subr.mxu0 0.0
        %671 = vmatpush1.msra.mxu0 0.0
        %672 = vmatprep.mubr.f32.mxu0 0.0
        %673 = vmatmul.mubr.f32.gmra.mrb[0].mxu0 %v606
        %v674 = vpop.f32.mrb[0].mxu0
        %v675 = vadd.f32 %v602, %v674
        %v676 = vpop.f32.mrb[0].mxu0
        %677 = vdwg.mxu0
        %v678 = vld [vmem:[%s6] sm:$0xff]
        %v679 = vld [vmem:[%s6 + $0x8] sm:$0xff]
        %v680 = vld [vmem:[%s7] sm:$0xff]
        %v681 = vld [vmem:[%s7 + $0x8] sm:$0xff]
        %v682 = vld [vmem:[%s533] sm:$0xff]
        %v683 = vld [vmem:[%s533 + $0x8] sm:$0xff]
        %685 = vset.pattern.permute.xlu0 0
        %686 = vperm.xlu0 %685, %v680
        %v687 = vpop.permute.xlu0 %686
        %690 = vset.pattern.permute.xlu0 0
        %691 = vperm.xlu0 %690, %v681
        %v692 = vpop.permute.xlu0 %691
        %v695 = vsel %vm604, %v678, 0
        %v698 = vsel %vm604, %v679, 0
        %700 = vmatprep.subr.mxu0 0.0
        %701 = vmatpush1.msra.mxu0 %v682
        %702 = vmatprep.subr.mxu0 0.0
        %703 = vmatpush1.msra.mxu0 %v683
        %704 = vmatprep.subr.mxu0 0.0
        %705 = vmatpush1.msra.mxu0 0.0
        %706 = vmatprep.subr.mxu0 0.0
        %707 = vmatpush1.msra.mxu0 0.0
        %708 = vmatprep.subr.mxu0 0.0
        %709 = vmatpush1.msra.mxu0 0.0
        %710 = vmatprep.subr.mxu0 0.0
        %711 = vmatpush1.msra.mxu0 0.0
        %712 = vmatprep.subr.mxu0 0.0
        %713 = vmatpush1.msra.mxu0 0.0
        %714 = vmatprep.subr.mxu0 0.0
        %715 = vmatpush1.msra.mxu0 0.0
        %716 = vmatprep.subr.mxu0 0.0
        %717 = vmatpush1.msra.mxu0 0.0
        %718 = vmatprep.subr.mxu0 0.0
        %719 = vmatpush1.msra.mxu0 0.0
        %720 = vmatprep.subr.mxu0 0.0
        %721 = vmatpush1.msra.mxu0 0.0
        %722 = vmatprep.subr.mxu0 0.0
        %723 = vmatpush1.msra.mxu0 0.0
        %724 = vmatprep.subr.mxu0 0.0
        %725 = vmatpush1.msra.mxu0 0.0
        %726 = vmatprep.subr.mxu0 0.0
        %727 = vmatpush1.msra.mxu0 0.0
        %728 = vmatprep.subr.mxu0 0.0
        %729 = vmatpush1.msra.mxu0 0.0
        %730 = vmatprep.subr.mxu0 0.0
        %731 = vmatpush1.msra.mxu0 0.0
        %732 = vmatprep.subr.mxu0 0.0
        %733 = vmatpush1.msra.mxu0 0.0
        %734 = vmatprep.subr.mxu0 0.0
        %735 = vmatpush1.msra.mxu0 0.0
        %736 = vmatprep.subr.mxu0 0.0
        %737 = vmatpush1.msra.mxu0 0.0
        %738 = vmatprep.subr.mxu0 0.0
        %739 = vmatpush1.msra.mxu0 0.0
        %740 = vmatprep.subr.mxu0 0.0
        %741 = vmatpush1.msra.mxu0 0.0
        %742 = vmatprep.subr.mxu0 0.0
        %743 = vmatpush1.msra.mxu0 0.0
        %744 = vmatprep.subr.mxu0 0.0
        %745 = vmatpush1.msra.mxu0 0.0
        %746 = vmatprep.subr.mxu0 0.0
        %747 = vmatpush1.msra.mxu0 0.0
        %748 = vmatprep.subr.mxu0 0.0
        %749 = vmatpush1.msra.mxu0 0.0
        %750 = vmatprep.subr.mxu0 0.0
        %751 = vmatpush1.msra.mxu0 0.0
        %752 = vmatprep.subr.mxu0 0.0
        %753 = vmatpush1.msra.mxu0 0.0
        %754 = vmatprep.subr.mxu0 0.0
        %755 = vmatpush1.msra.mxu0 0.0
        %756 = vmatprep.subr.mxu0 0.0
        %757 = vmatpush1.msra.mxu0 0.0
        %758 = vmatprep.subr.mxu0 0.0
        %759 = vmatpush1.msra.mxu0 0.0
        %760 = vmatprep.subr.mxu0 0.0
        %761 = vmatpush1.msra.mxu0 0.0
        %762 = vmatprep.subr.mxu0 0.0
        %763 = vmatpush1.msra.mxu0 0.0
        %764 = vmatprep.mubr.f32.mxu0 0.0
        %765 = vmatmul.mubr.f32.gmra.mrb[0].mxu0 %v695
        %v766 = vpop.f32.mrb[0].mxu0
        %v767 = vadd.f32 %v687, %v766
        %v768 = vpop.f32.mrb[0].mxu0
        %769 = vmatprep.mubr.f32.mxu0 0.0
        %770 = vmatmul.mubr.f32.gmra.mrb[0].mxu0 %v698
        %v771 = vpop.f32.mrb[0].mxu0
        %v772 = vadd.f32 %v692, %v771
        %v773 = vpop.f32.mrb[0].mxu0
        %774 = vdwg.mxu0
        %v775 = vld [vmem:[%s8] sm:$0xff]
        %v776 = vld [vmem:[%s9] sm:$0xff]
        %v777 = vld [vmem:[%s590] sm:$0xff]
        %779 = vset.pattern.permute.xlu0 0
        %780 = vperm.xlu0 %779, %v776
        %v781 = vpop.permute.xlu0 %780
        %vm783 = vcmask 64512
        %v785 = vsel %vm783, %v775, 0
        %787 = vmatprep.subr.mxu0 0.0
        %788 = vmatpush1.msra.mxu0 %v777
        %789 = vmatprep.subr.mxu0 0.0
        %790 = vmatpush1.msra.mxu0 0.0
        %791 = vmatprep.subr.mxu0 0.0
        %792 = vmatpush1.msra.mxu0 0.0
        %793 = vmatprep.subr.mxu0 0.0
        %794 = vmatpush1.msra.mxu0 0.0
        %795 = vmatprep.subr.mxu0 0.0
        %796 = vmatpush1.msra.mxu0 0.0
        %797 = vmatprep.subr.mxu0 0.0
        %798 = vmatpush1.msra.mxu0 0.0
        %799 = vmatprep.subr.mxu0 0.0
        %800 = vmatpush1.msra.mxu0 0.0
        %801 = vmatprep.subr.mxu0 0.0
        %802 = vmatpush1.msra.mxu0 0.0
        %803 = vmatprep.subr.mxu0 0.0
        %804 = vmatpush1.msra.mxu0 0.0
        %805 = vmatprep.subr.mxu0 0.0
        %806 = vmatpush1.msra.mxu0 0.0
        %807 = vmatprep.subr.mxu0 0.0
        %808 = vmatpush1.msra.mxu0 0.0
        %809 = vmatprep.subr.mxu0 0.0
        %810 = vmatpush1.msra.mxu0 0.0
        %811 = vmatprep.subr.mxu0 0.0
        %812 = vmatpush1.msra.mxu0 0.0
        %813 = vmatprep.subr.mxu0 0.0
        %814 = vmatpush1.msra.mxu0 0.0
        %815 = vmatprep.subr.mxu0 0.0
        %816 = vmatpush1.msra.mxu0 0.0
        %817 = vmatprep.subr.mxu0 0.0
        %818 = vmatpush1.msra.mxu0 0.0
        %819 = vmatprep.subr.mxu0 0.0
        %820 = vmatpush1.msra.mxu0 0.0
        %821 = vmatprep.subr.mxu0 0.0
        %822 = vmatpush1.msra.mxu0 0.0
        %823 = vmatprep.subr.mxu0 0.0
        %824 = vmatpush1.msra.mxu0 0.0
        %825 = vmatprep.subr.mxu0 0.0
        %826 = vmatpush1.msra.mxu0 0.0
        %827 = vmatprep.subr.mxu0 0.0
        %828 = vmatpush1.msra.mxu0 0.0
        %829 = vmatprep.subr.mxu0 0.0
        %830 = vmatpush1.msra.mxu0 0.0
        %831 = vmatprep.subr.mxu0 0.0
        %832 = vmatpush1.msra.mxu0 0.0
        %833 = vmatprep.subr.mxu0 0.0
        %834 = vmatpush1.msra.mxu0 0.0
        %835 = vmatprep.subr.mxu0 0.0
        %836 = vmatpush1.msra.mxu0 0.0
        %837 = vmatprep.subr.mxu0 0.0
        %838 = vmatpush1.msra.mxu0 0.0
        %839 = vmatprep.subr.mxu0 0.0
        %840 = vmatpush1.msra.mxu0 0.0
        %841 = vmatprep.subr.mxu0 0.0
        %842 = vmatpush1.msra.mxu0 0.0
        %843 = vmatprep.subr.mxu0 0.0
        %844 = vmatpush1.msra.mxu0 0.0
        %845 = vmatprep.subr.mxu0 0.0
        %846 = vmatpush1.msra.mxu0 0.0
        %847 = vmatprep.subr.mxu0 0.0
        %848 = vmatpush1.msra.mxu0 0.0
        %849 = vmatprep.subr.mxu0 0.0
        %850 = vmatpush1.msra.mxu0 0.0
        %851 = vmatprep.mubr.f32.mxu0 0.0
        %852 = vmatmul.mubr.f32.gmra.mrb[0].mxu0 %v785
        %v853 = vpop.f32.mrb[0].mxu0
        %v854 = vadd.f32 %v781, %v853
        %v855 = vpop.f32.mrb[0].mxu0
        %856 = vdwg.mxu0
        %v857 = vld [vmem:[%s10] sm:$0xff]
        %v858 = vld [vmem:[%s11] sm:$0xff]
        %v859 = vld [vmem:[%s594] sm:$0xff]
        %861 = vset.pattern.permute.xlu0 0
        %862 = vperm.xlu0 %861, %v858
        %v863 = vpop.permute.xlu0 %862
        %v866 = vsel %vm783, %v857, 0
        %868 = vmatprep.subr.mxu0 0.0
        %869 = vmatpush1.msra.mxu0 %v859
        %870 = vmatprep.subr.mxu0 0.0
        %871 = vmatpush1.msra.mxu0 0.0
        %872 = vmatprep.subr.mxu0 0.0
        %873 = vmatpush1.msra.mxu0 0.0
        %874 = vmatprep.subr.mxu0 0.0
        %875 = vmatpush1.msra.mxu0 0.0
        %876 = vmatprep.subr.mxu0 0.0
        %877 = vmatpush1.msra.mxu0 0.0
        %878 = vmatprep.subr.mxu0 0.0
        %879 = vmatpush1.msra.mxu0 0.0
        %880 = vmatprep.subr.mxu0 0.0
        %881 = vmatpush1.msra.mxu0 0.0
        %882 = vmatprep.subr.mxu0 0.0
        %883 = vmatpush1.msra.mxu0 0.0
        %884 = vmatprep.subr.mxu0 0.0
        %885 = vmatpush1.msra.mxu0 0.0
        %886 = vmatprep.subr.mxu0 0.0
        %887 = vmatpush1.msra.mxu0 0.0
        %888 = vmatprep.subr.mxu0 0.0
        %889 = vmatpush1.msra.mxu0 0.0
        %890 = vmatprep.subr.mxu0 0.0
        %891 = vmatpush1.msra.mxu0 0.0
        %892 = vmatprep.subr.mxu0 0.0
        %893 = vmatpush1.msra.mxu0 0.0
        %894 = vmatprep.subr.mxu0 0.0
        %895 = vmatpush1.msra.mxu0 0.0
        %896 = vmatprep.subr.mxu0 0.0
        %897 = vmatpush1.msra.mxu0 0.0
        %898 = vmatprep.subr.mxu0 0.0
        %899 = vmatpush1.msra.mxu0 0.0
        %900 = vmatprep.subr.mxu0 0.0
        %901 = vmatpush1.msra.mxu0 0.0
        %902 = vmatprep.subr.mxu0 0.0
        %903 = vmatpush1.msra.mxu0 0.0
        %904 = vmatprep.subr.mxu0 0.0
        %905 = vmatpush1.msra.mxu0 0.0
        %906 = vmatprep.subr.mxu0 0.0
        %907 = vmatpush1.msra.mxu0 0.0
        %908 = vmatprep.subr.mxu0 0.0
        %909 = vmatpush1.msra.mxu0 0.0
        %910 = vmatprep.subr.mxu0 0.0
        %911 = vmatpush1.msra.mxu0 0.0
        %912 = vmatprep.subr.mxu0 0.0
        %913 = vmatpush1.msra.mxu0 0.0
        %914 = vmatprep.subr.mxu0 0.0
        %915 = vmatpush1.msra.mxu0 0.0
        %916 = vmatprep.subr.mxu0 0.0
        %917 = vmatpush1.msra.mxu0 0.0
        %918 = vmatprep.subr.mxu0 0.0
        %919 = vmatpush1.msra.mxu0 0.0
        %920 = vmatprep.subr.mxu0 0.0
        %921 = vmatpush1.msra.mxu0 0.0
        %922 = vmatprep.subr.mxu0 0.0
        %923 = vmatpush1.msra.mxu0 0.0
        %924 = vmatprep.subr.mxu0 0.0
        %925 = vmatpush1.msra.mxu0 0.0
        %926 = vmatprep.subr.mxu0 0.0
        %927 = vmatpush1.msra.mxu0 0.0
        %928 = vmatprep.subr.mxu0 0.0
        %929 = vmatpush1.msra.mxu0 0.0
        %930 = vmatprep.subr.mxu0 0.0
        %931 = vmatpush1.msra.mxu0 0.0
        %932 = vmatprep.mubr.f32.mxu0 0.0
        %933 = vmatmul.mubr.f32.gmra.mrb[0].mxu0 %v866
        %v934 = vpop.f32.mrb[0].mxu0
        %v935 = vadd.f32 %v863, %v934
        %v936 = vpop.f32.mrb[0].mxu0
        %937 = vdwg.mxu0
        %v938 = vld [vmem:[%s12] sm:$0xff]
        %v939 = vld [vmem:[%s12 + $0x8] sm:$0xff]
        %v940 = vld [vmem:[%s13] sm:$0xff]
        %v941 = vld [vmem:[%s13 + $0x8] sm:$0xff]
        %v943 = vsel %vm783, %v938, 0
        %v946 = vsel %vm783, %v939, 0
        %948 = vmatprep.subr.mxu0 0.0
        %949 = vmatpush1.msra.mxu0 %v675
        %950 = vmatprep.subr.mxu0 0.0
        %951 = vmatpush1.msra.mxu0 0.0
        %952 = vmatprep.subr.mxu0 0.0
        %953 = vmatpush1.msra.mxu0 0.0
        %954 = vmatprep.subr.mxu0 0.0
        %955 = vmatpush1.msra.mxu0 0.0
        %956 = vmatprep.subr.mxu0 0.0
        %957 = vmatpush1.msra.mxu0 0.0
        %958 = vmatprep.subr.mxu0 0.0
        %959 = vmatpush1.msra.mxu0 0.0
        %960 = vmatprep.subr.mxu0 0.0
        %961 = vmatpush1.msra.mxu0 0.0
        %962 = vmatprep.subr.mxu0 0.0
        %963 = vmatpush1.msra.mxu0 0.0
        %964 = vmatprep.subr.mxu0 0.0
        %965 = vmatpush1.msra.mxu0 0.0
        %966 = vmatprep.subr.mxu0 0.0
        %967 = vmatpush1.msra.mxu0 0.0
        %968 = vmatprep.subr.mxu0 0.0
        %969 = vmatpush1.msra.mxu0 0.0
        %970 = vmatprep.subr.mxu0 0.0
        %971 = vmatpush1.msra.mxu0 0.0
        %972 = vmatprep.subr.mxu0 0.0
        %973 = vmatpush1.msra.mxu0 0.0
        %974 = vmatprep.subr.mxu0 0.0
        %975 = vmatpush1.msra.mxu0 0.0
        %976 = vmatprep.subr.mxu0 0.0
        %977 = vmatpush1.msra.mxu0 0.0
        %978 = vmatprep.subr.mxu0 0.0
        %979 = vmatpush1.msra.mxu0 0.0
        %980 = vmatprep.subr.mxu0 0.0
        %981 = vmatpush1.msra.mxu0 0.0
        %982 = vmatprep.subr.mxu0 0.0
        %983 = vmatpush1.msra.mxu0 0.0
        %984 = vmatprep.subr.mxu0 0.0
        %985 = vmatpush1.msra.mxu0 0.0
        %986 = vmatprep.subr.mxu0 0.0
        %987 = vmatpush1.msra.mxu0 0.0
        %988 = vmatprep.subr.mxu0 0.0
        %989 = vmatpush1.msra.mxu0 0.0
        %990 = vmatprep.subr.mxu0 0.0
        %991 = vmatpush1.msra.mxu0 0.0
        %992 = vmatprep.subr.mxu0 0.0
        %993 = vmatpush1.msra.mxu0 0.0
        %994 = vmatprep.subr.mxu0 0.0
        %995 = vmatpush1.msra.mxu0 0.0
        %996 = vmatprep.subr.mxu0 0.0
        %997 = vmatpush1.msra.mxu0 0.0
        %998 = vmatprep.subr.mxu0 0.0
        %999 = vmatpush1.msra.mxu0 0.0
        %1000 = vmatprep.subr.mxu0 0.0
        %1001 = vmatpush1.msra.mxu0 0.0
        %1002 = vmatprep.subr.mxu0 0.0
        %1003 = vmatpush1.msra.mxu0 0.0
        %1004 = vmatprep.subr.mxu0 0.0
        %1005 = vmatpush1.msra.mxu0 0.0
        %1006 = vmatprep.subr.mxu0 0.0
        %1007 = vmatpush1.msra.mxu0 0.0
        %1008 = vmatprep.subr.mxu0 0.0
        %1009 = vmatpush1.msra.mxu0 0.0
        %1010 = vmatprep.subr.mxu0 0.0
        %1011 = vmatpush1.msra.mxu0 0.0
        %1012 = vmatprep.mubr.f32.mxu0 0.0
        %1013 = vmatmul.mubr.f32.gmra.mrb[0].mxu0 %v943
        %v1014 = vpop.f32.mrb[0].mxu0
        %v1015 = vadd.f32 0.0, %v1014
        %v1016 = vpop.f32.mrb[0].mxu0
        %1017 = vmatprep.mubr.f32.mxu0 0.0
        %1018 = vmatmul.mubr.f32.gmra.mrb[0].mxu0 %v946
        %v1019 = vpop.f32.mrb[0].mxu0
        %v1020 = vadd.f32 0.0, %v1019
        %v1021 = vpop.f32.mrb[0].mxu0
        %1022 = vdwg.mxu0
        %1024 = vset.pattern.permute.xlu0 0
        %1025 = vperm.xlu0 %1024, %v940
        %v1026 = vpop.permute.xlu0 %1025
        %1029 = vset.pattern.permute.xlu0 0
        %1030 = vperm.xlu0 %1029, %v941
        %v1031 = vpop.permute.xlu0 %1030
        %v1033 = vadd.f32 %v1026, %v1015
        %v1034 = vadd.f32 %v1031, %v1020
        %1035 = vrot.lane.b32.xlu0 %v938, 120
        %v1036 = vpop.permute.xlu0 %1035
        %1037 = vrot.lane.b32.xlu0 %v939, 120
        %v1038 = vpop.permute.xlu0 %1037
        %v1039 = vsel %vm604, %v1036, 0
        %v1041 = vsel %vm604, %v1038, 0
        %1043 = vmatprep.subr.mxu0 0.0
        %1044 = vmatpush1.msra.mxu0 %v767
        %1045 = vmatprep.subr.mxu0 0.0
        %1046 = vmatpush1.msra.mxu0 %v772
        %1047 = vmatprep.subr.mxu0 0.0
        %1048 = vmatpush1.msra.mxu0 0.0
        %1049 = vmatprep.subr.mxu0 0.0
        %1050 = vmatpush1.msra.mxu0 0.0
        %1051 = vmatprep.subr.mxu0 0.0
        %1052 = vmatpush1.msra.mxu0 0.0
        %1053 = vmatprep.subr.mxu0 0.0
        %1054 = vmatpush1.msra.mxu0 0.0
        %1055 = vmatprep.subr.mxu0 0.0
        %1056 = vmatpush1.msra.mxu0 0.0
        %1057 = vmatprep.subr.mxu0 0.0
        %1058 = vmatpush1.msra.mxu0 0.0
        %1059 = vmatprep.subr.mxu0 0.0
        %1060 = vmatpush1.msra.mxu0 0.0
        %1061 = vmatprep.subr.mxu0 0.0
        %1062 = vmatpush1.msra.mxu0 0.0
        %1063 = vmatprep.subr.mxu0 0.0
        %1064 = vmatpush1.msra.mxu0 0.0
        %1065 = vmatprep.subr.mxu0 0.0
        %1066 = vmatpush1.msra.mxu0 0.0
        %1067 = vmatprep.subr.mxu0 0.0
        %1068 = vmatpush1.msra.mxu0 0.0
        %1069 = vmatprep.subr.mxu0 0.0
        %1070 = vmatpush1.msra.mxu0 0.0
        %1071 = vmatprep.subr.mxu0 0.0
        %1072 = vmatpush1.msra.mxu0 0.0
        %1073 = vmatprep.subr.mxu0 0.0
        %1074 = vmatpush1.msra.mxu0 0.0
        %1075 = vmatprep.subr.mxu0 0.0
        %1076 = vmatpush1.msra.mxu0 0.0
        %1077 = vmatprep.subr.mxu0 0.0
        %1078 = vmatpush1.msra.mxu0 0.0
        %1079 = vmatprep.subr.mxu0 0.0
        %1080 = vmatpush1.msra.mxu0 0.0
        %1081 = vmatprep.subr.mxu0 0.0
        %1082 = vmatpush1.msra.mxu0 0.0
        %1083 = vmatprep.subr.mxu0 0.0
        %1084 = vmatpush1.msra.mxu0 0.0
        %1085 = vmatprep.subr.mxu0 0.0
        %1086 = vmatpush1.msra.mxu0 0.0
        %1087 = vmatprep.subr.mxu0 0.0
        %1088 = vmatpush1.msra.mxu0 0.0
        %1089 = vmatprep.subr.mxu0 0.0
        %1090 = vmatpush1.msra.mxu0 0.0
        %1091 = vmatprep.subr.mxu0 0.0
        %1092 = vmatpush1.msra.mxu0 0.0
        %1093 = vmatprep.subr.mxu0 0.0
        %1094 = vmatpush1.msra.mxu0 0.0
        %1095 = vmatprep.subr.mxu0 0.0
        %1096 = vmatpush1.msra.mxu0 0.0
        %1097 = vmatprep.subr.mxu0 0.0
        %1098 = vmatpush1.msra.mxu0 0.0
        %1099 = vmatprep.subr.mxu0 0.0
        %1100 = vmatpush1.msra.mxu0 0.0
        %1101 = vmatprep.subr.mxu0 0.0
        %1102 = vmatpush1.msra.mxu0 0.0
        %1103 = vmatprep.subr.mxu0 0.0
        %1104 = vmatpush1.msra.mxu0 0.0
        %1105 = vmatprep.subr.mxu0 0.0
        %1106 = vmatpush1.msra.mxu0 0.0
        %1107 = vmatprep.mubr.f32.mxu0 0.0
        %1108 = vmatmul.mubr.f32.gmra.mrb[0].mxu0 %v1039
        %v1109 = vpop.f32.mrb[0].mxu0
        %v1110 = vadd.f32 0.0, %v1109
        %v1111 = vpop.f32.mrb[0].mxu0
        %1112 = vmatprep.mubr.f32.mxu0 0.0
        %1113 = vmatmul.mubr.f32.gmra.mrb[0].mxu0 %v1041
        %v1114 = vpop.f32.mrb[0].mxu0
        %v1115 = vadd.f32 0.0, %v1114
        %v1116 = vpop.f32.mrb[0].mxu0
        %1117 = vdwg.mxu0
        %v1118 = vadd.f32 %v1033, %v1110
        %v1119 = vadd.f32 %v1034, %v1115
        %1120 = vrot.lane.b32.xlu0 %v938, 104
        %v1121 = vpop.permute.xlu0 %1120
        %1122 = vrot.lane.b32.xlu0 %v939, 104
        %v1123 = vpop.permute.xlu0 %1122
        %v1124 = vsel %vm783, %v1121, 0
        %v1126 = vsel %vm783, %v1123, 0
        %1128 = vmatprep.subr.mxu0 0.0
        %1129 = vmatpush1.msra.mxu0 %v854
        %1130 = vmatprep.subr.mxu0 0.0
        %1131 = vmatpush1.msra.mxu0 0.0
        %1132 = vmatprep.subr.mxu0 0.0
        %1133 = vmatpush1.msra.mxu0 0.0
        %1134 = vmatprep.subr.mxu0 0.0
        %1135 = vmatpush1.msra.mxu0 0.0
        %1136 = vmatprep.subr.mxu0 0.0
        %1137 = vmatpush1.msra.mxu0 0.0
        %1138 = vmatprep.subr.mxu0 0.0
        %1139 = vmatpush1.msra.mxu0 0.0
        %1140 = vmatprep.subr.mxu0 0.0
        %1141 = vmatpush1.msra.mxu0 0.0
        %1142 = vmatprep.subr.mxu0 0.0
        %1143 = vmatpush1.msra.mxu0 0.0
        %1144 = vmatprep.subr.mxu0 0.0
        %1145 = vmatpush1.msra.mxu0 0.0
        %1146 = vmatprep.subr.mxu0 0.0
        %1147 = vmatpush1.msra.mxu0 0.0
        %1148 = vmatprep.subr.mxu0 0.0
        %1149 = vmatpush1.msra.mxu0 0.0
        %1150 = vmatprep.subr.mxu0 0.0
        %1151 = vmatpush1.msra.mxu0 0.0
        %1152 = vmatprep.subr.mxu0 0.0
        %1153 = vmatpush1.msra.mxu0 0.0
        %1154 = vmatprep.subr.mxu0 0.0
        %1155 = vmatpush1.msra.mxu0 0.0
        %1156 = vmatprep.subr.mxu0 0.0
        %1157 = vmatpush1.msra.mxu0 0.0
        %1158 = vmatprep.subr.mxu0 0.0
        %1159 = vmatpush1.msra.mxu0 0.0
        %1160 = vmatprep.subr.mxu0 0.0
        %1161 = vmatpush1.msra.mxu0 0.0
        %1162 = vmatprep.subr.mxu0 0.0
        %1163 = vmatpush1.msra.mxu0 0.0
        %1164 = vmatprep.subr.mxu0 0.0
        %1165 = vmatpush1.msra.mxu0 0.0
        %1166 = vmatprep.subr.mxu0 0.0
        %1167 = vmatpush1.msra.mxu0 0.0
        %1168 = vmatprep.subr.mxu0 0.0
        %1169 = vmatpush1.msra.mxu0 0.0
        %1170 = vmatprep.subr.mxu0 0.0
        %1171 = vmatpush1.msra.mxu0 0.0
        %1172 = vmatprep.subr.mxu0 0.0
        %1173 = vmatpush1.msra.mxu0 0.0
        %1174 = vmatprep.subr.mxu0 0.0
        %1175 = vmatpush1.msra.mxu0 0.0
        %1176 = vmatprep.subr.mxu0 0.0
        %1177 = vmatpush1.msra.mxu0 0.0
        %1178 = vmatprep.subr.mxu0 0.0
        %1179 = vmatpush1.msra.mxu0 0.0
        %1180 = vmatprep.subr.mxu0 0.0
        %1181 = vmatpush1.msra.mxu0 0.0
        %1182 = vmatprep.subr.mxu0 0.0
        %1183 = vmatpush1.msra.mxu0 0.0
        %1184 = vmatprep.subr.mxu0 0.0
        %1185 = vmatpush1.msra.mxu0 0.0
        %1186 = vmatprep.subr.mxu0 0.0
        %1187 = vmatpush1.msra.mxu0 0.0
        %1188 = vmatprep.subr.mxu0 0.0
        %1189 = vmatpush1.msra.mxu0 0.0
        %1190 = vmatprep.subr.mxu0 0.0
        %1191 = vmatpush1.msra.mxu0 0.0
        %1192 = vmatprep.mubr.f32.mxu0 0.0
        %1193 = vmatmul.mubr.f32.gmra.mrb[0].mxu0 %v1124
        %v1194 = vpop.f32.mrb[0].mxu0
        %v1195 = vadd.f32 0.0, %v1194
        %v1196 = vpop.f32.mrb[0].mxu0
        %1197 = vmatprep.mubr.f32.mxu0 0.0
        %1198 = vmatmul.mubr.f32.gmra.mrb[0].mxu0 %v1126
        %v1199 = vpop.f32.mrb[0].mxu0
        %v1200 = vadd.f32 0.0, %v1199
        %v1201 = vpop.f32.mrb[0].mxu0
        %1202 = vdwg.mxu0
        %v1203 = vadd.f32 %v1118, %v1195
        %v1204 = vadd.f32 %v1119, %v1200
        %1205 = vrot.lane.b32.xlu0 %v938, 96
        %v1206 = vpop.permute.xlu0 %1205
        %1207 = vrot.lane.b32.xlu0 %v939, 96
        %v1208 = vpop.permute.xlu0 %1207
        %v1209 = vsel %vm783, %v1206, 0
        %v1211 = vsel %vm783, %v1208, 0
        %1213 = vmatprep.subr.mxu0 0.0
        %1214 = vmatpush1.msra.mxu0 %v935
        %1215 = vmatprep.subr.mxu0 0.0
        %1216 = vmatpush1.msra.mxu0 0.0
        %1217 = vmatprep.subr.mxu0 0.0
        %1218 = vmatpush1.msra.mxu0 0.0
        %1219 = vmatprep.subr.mxu0 0.0
        %1220 = vmatpush1.msra.mxu0 0.0
        %1221 = vmatprep.subr.mxu0 0.0
        %1222 = vmatpush1.msra.mxu0 0.0
        %1223 = vmatprep.subr.mxu0 0.0
        %1224 = vmatpush1.msra.mxu0 0.0
        %1225 = vmatprep.subr.mxu0 0.0
        %1226 = vmatpush1.msra.mxu0 0.0
        %1227 = vmatprep.subr.mxu0 0.0
        %1228 = vmatpush1.msra.mxu0 0.0
        %1229 = vmatprep.subr.mxu0 0.0
        %1230 = vmatpush1.msra.mxu0 0.0
        %1231 = vmatprep.subr.mxu0 0.0
        %1232 = vmatpush1.msra.mxu0 0.0
        %1233 = vmatprep.subr.mxu0 0.0
        %1234 = vmatpush1.msra.mxu0 0.0
        %1235 = vmatprep.subr.mxu0 0.0
        %1236 = vmatpush1.msra.mxu0 0.0
        %1237 = vmatprep.subr.mxu0 0.0
        %1238 = vmatpush1.msra.mxu0 0.0
        %1239 = vmatprep.subr.mxu0 0.0
        %1240 = vmatpush1.msra.mxu0 0.0
        %1241 = vmatprep.subr.mxu0 0.0
        %1242 = vmatpush1.msra.mxu0 0.0
        %1243 = vmatprep.subr.mxu0 0.0
        %1244 = vmatpush1.msra.mxu0 0.0
        %1245 = vmatprep.subr.mxu0 0.0
        %1246 = vmatpush1.msra.mxu0 0.0
        %1247 = vmatprep.subr.mxu0 0.0
        %1248 = vmatpush1.msra.mxu0 0.0
        %1249 = vmatprep.subr.mxu0 0.0
        %1250 = vmatpush1.msra.mxu0 0.0
        %1251 = vmatprep.subr.mxu0 0.0
        %1252 = vmatpush1.msra.mxu0 0.0
        %1253 = vmatprep.subr.mxu0 0.0
        %1254 = vmatpush1.msra.mxu0 0.0
        %1255 = vmatprep.subr.mxu0 0.0
        %1256 = vmatpush1.msra.mxu0 0.0
        %1257 = vmatprep.subr.mxu0 0.0
        %1258 = vmatpush1.msra.mxu0 0.0
        %1259 = vmatprep.subr.mxu0 0.0
        %1260 = vmatpush1.msra.mxu0 0.0
        %1261 = vmatprep.subr.mxu0 0.0
        %1262 = vmatpush1.msra.mxu0 0.0
        %1263 = vmatprep.subr.mxu0 0.0
        %1264 = vmatpush1.msra.mxu0 0.0
        %1265 = vmatprep.subr.mxu0 0.0
        %1266 = vmatpush1.msra.mxu0 0.0
        %1267 = vmatprep.subr.mxu0 0.0
        %1268 = vmatpush1.msra.mxu0 0.0
        %1269 = vmatprep.subr.mxu0 0.0
        %1270 = vmatpush1.msra.mxu0 0.0
        %1271 = vmatprep.subr.mxu0 0.0
        %1272 = vmatpush1.msra.mxu0 0.0
        %1273 = vmatprep.subr.mxu0 0.0
        %1274 = vmatpush1.msra.mxu0 0.0
        %1275 = vmatprep.subr.mxu0 0.0
        %1276 = vmatpush1.msra.mxu0 0.0
        %1277 = vmatprep.mubr.f32.mxu0 0.0
        %1278 = vmatmul.mubr.f32.gmra.mrb[0].mxu0 %v1209
        %v1279 = vpop.f32.mrb[0].mxu0
        %v1280 = vadd.f32 0.0, %v1279
        %v1281 = vpop.f32.mrb[0].mxu0
        %1282 = vmatprep.mubr.f32.mxu0 0.0
        %1283 = vmatmul.mubr.f32.gmra.mrb[0].mxu0 %v1211
        %v1284 = vpop.f32.mrb[0].mxu0
        %v1285 = vadd.f32 0.0, %v1284
        %v1286 = vpop.f32.mrb[0].mxu0
        %1287 = vdwg.mxu0
        %v1288 = vadd.f32 %v1203, %v1280
        %v1289 = vadd.f32 %v1204, %v1285
        %v1290 = vadd.f32 %v1288, %v1289
        %v1291 = vrot.slane %v1290, 4
        %v1292 = vadd.f32 %v1290, %v1291
        %v1293 = vrot.slane %v1292, 2
        %v1294 = vadd.f32 %v1292, %v1293
        %v1295 = vrot.slane %v1294, 1
        %v1296 = vadd.f32 %v1294, %v1295
        %v1297 = vrcp.pop 16.0
        %v1298 = vmul.f32 %v1296, %v1297
        %v1299 = vsub.f32 0.0, %v1298
        %v1300 = vmul.f32 %v1299, 1.442695
        %v1301 = vpow.pop %v1300
        %v1302 = vadd.f32 %v1301, 1.0
        %v1303 = vrcp.pop %v1302
        %v1304 = vmul.f32 1.0, %v1303
        %1305 = vst [vmem:[%s586] sm:$0x1] %v1304
        %s1306 = sand.u32 %s350, 1
        %s1307 = scalar_lea.sflag [#allocation5], %s1306
        %s1308 = sand.u32 %s350, 1
        %s1309 = scalar_lea.vmem [#allocation4], %s1308
        // Predicated region
        $region153: #{tower_collection_forward.1} parent=143 // pred_check
          %p1310 = pneg %p360
        $region154: #{tower_collection_forward.1} parent=143 // pred_check_branch
          %1312 = sbr.rel (%p1310) target = $region156
        $region155: #{tower_collection_forward.1} parent=143 // pred_region
          %s1314 = ssub.s32 16, 16
          %1315 = vsyncadd %s1307, %s1314
          %s1316 = smul.addr %s28, 16
          %s1317 = scalar_lea.hbm %s14, %s1316
          %s1319 = sshll.u32 %s1309, 4
          %s1320 = int_to_ptr.vmem [resolvable:$true] %s1319
          %1322 = dma.vmem_to_hbm [thread:$0]  %s1320, 16, %s1317, %s1307
        $region156: #{tower_collection_forward.1} parent=143 // pred_fallthru
          _
      $region144: #{tower_collection_forward.1} parent=5 // pred_fallthru
        _
      %p1323 = scmp.le.s32.totalorder 2, %s23
      // Predicated region
      $region157: #{tower_collection_forward.1} parent=5 // pred_check
        %p1324 = pneg %p1323
      $region158: #{tower_collection_forward.1} parent=5 // pred_check_branch
        %1326 = sbr.rel (%p1324) target = $region160
      $region159: #{tower_collection_forward.1} parent=5 // pred_region
        %s1327 = ssub.s32 %s23, 2
        // Predicated region
        $region161: #{tower_collection_forward.1} parent=159 // pred_check
          %p1328 = pneg %p366
        $region162: #{tower_collection_forward.1} parent=159 // pred_check_branch
          %1330 = sbr.rel (%p1328) target = $region164
        $region163: #{tower_collection_forward.1} parent=159 // pred_region
          %s1331 = sand.u32 %s351, 1
          %s1332 = scalar_lea.sflag [#allocation5], %s1331
          %s1333 = sand.u32 %s351, 1
          %s1334 = scalar_lea.vmem [#allocation4], %s1333
          %1335 = dma.done %s1332, 16
        $region164: #{tower_collection_forward.1} parent=159 // pred_fallthru
          _
      $region160: #{tower_collection_forward.1} parent=5 // pred_fallthru
        _
    $region6: #{tower_collection_forward.1} parent=1 // loop_footer
      %s27 = sadd.s32 1, %s23
    $region7: #{tower_collection_forward.1} parent=1 // loop_footer_branch
      %22 = sbr.rel target = $region3
    $region8: #{tower_collection_forward.1} parent=1 // loop_exit
      _
    %1336 = vsyncpa [#allocation5], 1
    %s1337 = scalar_lea.sflag [#allocation5], 1
    %1338 = vsyncpa %s1337, 1

</llo_original>
